<compile_context>
chip_gen: v6e
topology: v6e:2x2x1
jax: 0.10.0
libtpu: 0.0.40
codegen_flags: <defaults>
</compile_context>

<pallas_src>
import functools

import jax
import jax.numpy as jnp
from jax import lax
from jax.experimental import pallas as pl
from jax.experimental.pallas import tpu as pltpu


def _cbam_kernel(x_ref, w1t_ref, b1_ref, w2_ref, b2_ref,
                 ws1t_ref, bs1_ref, wmask_ref, bs2_ref, o_ref, *, shifts):
    """One grid step: Bt batch elements; channels on sublanes, H*W on lanes.

    x_ref / o_ref : (Bt, C, HW)
    w1t (C, Cm)  b1 (1, Cm)      channel-attention conv #1 (transposed)
    w2  (C, Cm)  b2 (C, 1)       channel-attention conv #2
    ws1t (C, Cm) bs1 (Cm, 1)     spatial-attention 1x1 conv (transposed)
    wmask (49, Cm, HW)           7x7 weights folded with zero-pad validity masks
    bs2 (1, 1)                   7x7 conv bias
    shifts: tuple of 49 static lane shifts (same tap order as wmask rows)
    """
    x = x_ref[...]                                               # (Bt, C, HW) f32
    bt, _, hw = x.shape
    cm = ws1t_ref.shape[1]

    # ---- channel attention: GAP -> 1x1 -> ReLU -> 1x1 -> sigmoid (VPU only,
    # channels kept on sublanes so the gate broadcasts straight onto x).
    pooled = jnp.sum(x, axis=2, keepdims=True) * (1.0 / hw)      # (Bt, C, 1)
    h = jnp.maximum(
        jnp.sum(pooled * w1t_ref[...][None], axis=1, keepdims=True)
        + b1_ref[...][None], 0.0)                                # (Bt, 1, Cm)
    ch = jax.nn.sigmoid(
        jnp.sum(h * w2_ref[...][None], axis=2, keepdims=True)
        + b2_ref[...][None])                                     # (Bt, C, 1)
    y = x * ch                                                   # (Bt, C, HW)

    # Stage the channel-gated tensor in the VMEM output block so it does not
    # have to stay live in vregs across the 49-tap loop.
    o_ref[...] = y

    # ---- spatial attention 1x1 conv + ReLU: Cm weighted sublane reductions
    # (Cm = C/16 output rows => <2% MXU utilisation, so stay on the VPU).
    ws1t = ws1t_ref[...]                                         # (C, Cm)
    parts = [jnp.sum(y * ws1t[None, :, m:m + 1], axis=1, keepdims=True)
             for m in range(cm)]                                 # Cm x (Bt, 1, HW)
    hid3 = jnp.maximum(jnp.concatenate(parts, axis=1)
                       + bs1_ref[...][None], 0.0)                # (Bt, Cm, HW)
    hids = [hid3[b] for b in range(bt)]                          # Bt x (Cm, HW)

    # ---- 7x7 conv (padding=3, single output channel): 49 static lane rolls
    # (XLU) times host-folded weight*mask tiles (VPU), accumulated in f32.
    accs = [None] * bt
    for t in range(len(shifts)):
        wm = wmask_ref[t]                                        # (Cm, HW)
        s = shifts[t]
        for b in range(bt):
            src = hids[b] if s == 0 else pltpu.roll(hids[b], shift=s, axis=1)
            term = src * wm
            accs[b] = term if accs[b] is None else accs[b] + term

    bs2 = bs2_ref[...]                                           # (1, 1)
    for b in range(bt):
        sp = jax.nn.sigmoid(jnp.sum(accs[b], axis=0, keepdims=True) + bs2)  # (1, HW)
        o_ref[b] = (o_ref[b] * sp).astype(o_ref.dtype)


def _resident_spec(a):
    nd = a.ndim
    return pl.BlockSpec(a.shape, lambda i, _nd=nd: (0,) * _nd)


def _weighted_tap_masks(w7, H, W):
    """(49, Cm, H*W): 7x7 conv weights folded with zero-padding validity masks."""
    pos = jnp.arange(H * W, dtype=jnp.int32)
    hpos = pos // W
    wpos = pos % W
    rows = []
    for dy in range(7):
        for dx in range(7):
            dyy, dxx = dy - 3, dx - 3
            valid = ((hpos + dyy >= 0) & (hpos + dyy < H) &
                     (wpos + dxx >= 0) & (wpos + dxx < W)).astype(jnp.float32)
            rows.append(w7[0, :, dy, dx][:, None] * valid[None, :])   # (Cm, HW)
    return jnp.stack(rows, axis=0)


def _tap_shifts(H, W):
    """Static lane shift per 7x7 tap, same (dy, dx) order as _weighted_tap_masks."""
    HW = H * W
    return tuple(int((-((dy - 3) * W + (dx - 3))) % HW)
                 for dy in range(7) for dx in range(7))


def _pick_block_batch(N, C, HW, itemsize=4, target_block_bytes=256 * 1024):
    """Largest divisor of N whose x block stays under the byte target while
    keeping >= 2 grid steps (so v7x can split the batch over its 2 TCs)."""
    best = 1
    for bt in range(1, N + 1):
        if N % bt:
            continue
        if bt * C * HW * itemsize > target_block_bytes:
            continue
        if N >= 2 and N // bt < 2:
            continue
        best = bt
    return best


def cbam_forward(x_nchw, params, block_batch=None):
    w1, b1, w2, b2, ws1, bs1, w7, bs2 = params      # PyTorch Conv2d layouts
    N, C, H, W = x_nchw.shape
    Cm = w1.shape[0]
    HW = H * W

    x = x_nchw.reshape(N, C, HW).astype(jnp.float32)   # free reshape, no transpose

    # Kernel-side weight layouts (channels on sublanes everywhere).
    w1t = jnp.transpose(w1[:, :, 0, 0])             # (C, Cm)
    b1r = b1.reshape(1, Cm)
    w2m = w2[:, :, 0, 0]                            # (C, Cm)
    b2c = b2.reshape(C, 1)
    ws1t = jnp.transpose(ws1[:, :, 0, 0])           # (C, Cm)
    bs1c = bs1.reshape(Cm, 1)
    wmask = _weighted_tap_masks(w7, H, W)           # (49, Cm, HW)
    bs2s = bs2.reshape(1, 1)
    shifts = _tap_shifts(H, W)

    Bt = _pick_block_batch(N, C, HW) if block_batch is None else block_batch
    assert N % Bt == 0, (N, Bt)
    grid = (N // Bt,)

    kernel = functools.partial(_cbam_kernel, shifts=shifts)
    out = pl.pallas_call(
        kernel,
        out_shape=jax.ShapeDtypeStruct((N, C, HW), jnp.float32),
        grid_spec=pltpu.PrefetchScalarGridSpec(
            num_scalar_prefetch=0,
            grid=grid,
            in_specs=[pl.BlockSpec((Bt, C, HW), lambda i: (i, 0, 0))]
                     + [_resident_spec(a) for a in
                        (w1t, b1r, w2m, b2c, ws1t, bs1c, wmask, bs2s)],
            out_specs=pl.BlockSpec((Bt, C, HW), lambda i: (i, 0, 0)),
        ),
        # Batch blocks are independent -> v7x can shard them over its 2 TCs.
        # (If a large block_batch is requested, raise vmem_limit_bytes here.)
        compiler_params=pltpu.CompilerParams(dimension_semantics=("parallel",)),
    )(x, w1t, b1r, w2m, b2c, ws1t, bs1c, wmask, bs2s)

    return out.reshape(N, C, H, W)


def cbam_reference(x_nchw, params):
    """Pure-JAX reference matching the PyTorch forward (NCHW in/out, f32)."""
    w1, b1, w2, b2, ws1, bs1, w7, bs2 = params
    hi = lax.Precision.HIGHEST
    x = x_nchw.astype(jnp.float32)
    pooled = x.mean(axis=(2, 3))                                        # (N, C)
    h = jax.nn.relu(jnp.dot(pooled, w1[:, :, 0, 0].T, precision=hi) + b1)
    ch = jax.nn.sigmoid(jnp.dot(h, w2[:, :, 0, 0].T, precision=hi) + b2)
    y = x * ch[:, :, None, None]
    hid = jax.nn.relu(
        jnp.einsum('nchw,mc->nmhw', y, ws1[:, :, 0, 0], precision=hi)
        + bs1[None, :, None, None])
    sp = lax.conv_general_dilated(
        hid, w7, (1, 1), [(3, 3), (3, 3)],
        dimension_numbers=('NCHW', 'OIHW', 'NCHW'), precision=hi) + bs2[0]
    return y * jax.nn.sigmoid(sp)


def init_params(key, C):
    """Deterministic synthetic weights, PyTorch Conv2d layouts."""
    Cm = C // 16
    ks = jax.random.split(key, 8)
    w1 = jax.random.normal(ks[0], (Cm, C, 1, 1), jnp.float32) * 0.2
    b1 = jax.random.normal(ks[1], (Cm,), jnp.float32) * 0.1
    w2 = jax.random.normal(ks[2], (C, Cm, 1, 1), jnp.float32) * 0.2
    b2 = jax.random.normal(ks[3], (C,), jnp.float32) * 0.1
    ws1 = jax.random.normal(ks[4], (Cm, C, 1, 1), jnp.float32) * 0.2
    bs1 = jax.random.normal(ks[5], (Cm,), jnp.float32) * 0.1
    w7 = jax.random.normal(ks[6], (1, Cm, 7, 7), jnp.float32) * 0.05
    bs2 = jax.random.normal(ks[7], (1,), jnp.float32) * 0.1
    return (w1, b1, w2, b2, ws1, bs1, w7, bs2)


if __name__ == "__main__":
    N, C, H, W = 2, 32, 16, 16      # C must be >= 16 (in_channels // 16 reduction)
    key = jax.random.PRNGKey(0)
    kx, kp = jax.random.split(key)
    x = jax.random.normal(kx, (N, C, H, W), jnp.float32)
    params = init_params(kp, C)

    out = cbam_forward(x, params)
    jax.block_until_ready(out)

    ref = cbam_reference(x, params)
    assert out.shape == (N, C, H, W)
    max_err = float(jnp.max(jnp.abs(out - ref)))
    assert max_err < 1e-4, max_err
    print("KERNEL_OK")
</pallas_src>

<mosaic_0001>
module attributes {stable_mosaic.version = 11 : i64} {
  func.func @_cbam_kernel(%arg0: i32, %arg1: memref<1x32x256xf32, #tpu.memory_space<vmem>>, %arg2: memref<32x2xf32, #tpu.memory_space<vmem>>, %arg3: memref<1x2xf32, #tpu.memory_space<vmem>>, %arg4: memref<32x2xf32, #tpu.memory_space<vmem>>, %arg5: memref<32x1xf32, #tpu.memory_space<vmem>>, %arg6: memref<32x2xf32, #tpu.memory_space<vmem>>, %arg7: memref<2x1xf32, #tpu.memory_space<vmem>>, %arg8: memref<49x2x256xf32, #tpu.memory_space<vmem>>, %arg9: memref<1x1xf32, #tpu.memory_space<vmem>>, %arg10: memref<1x32x256xf32, #tpu.memory_space<vmem>>) attributes {dimension_semantics = [#tpu.dimension_semantics<parallel>], iteration_bounds = array<i64: 2>, scalar_prefetch = 0 : i64, scratch_operands = 0 : i64, tpu.core_type = #tpu.core_type<tc>, window_params = [{transform_indices = @transform_0, window_bounds = array<i64: 1, 32, 256>}, {pipeline_mode = #tpu.pipeline_mode<synchronous>, transform_indices = @transform_1, window_bounds = array<i64: 32, 2>}, {pipeline_mode = #tpu.pipeline_mode<synchronous>, transform_indices = @transform_2, window_bounds = array<i64: 1, 2>}, {pipeline_mode = #tpu.pipeline_mode<synchronous>, transform_indices = @transform_3, window_bounds = array<i64: 32, 2>}, {pipeline_mode = #tpu.pipeline_mode<synchronous>, transform_indices = @transform_4, window_bounds = array<i64: 32, 1>}, {pipeline_mode = #tpu.pipeline_mode<synchronous>, transform_indices = @transform_5, window_bounds = array<i64: 32, 2>}, {pipeline_mode = #tpu.pipeline_mode<synchronous>, transform_indices = @transform_6, window_bounds = array<i64: 2, 1>}, {pipeline_mode = #tpu.pipeline_mode<synchronous>, transform_indices = @transform_7, window_bounds = array<i64: 49, 2, 256>}, {pipeline_mode = #tpu.pipeline_mode<synchronous>, transform_indices = @transform_8, window_bounds = array<i64: 1, 1>}, {transform_indices = @transform_9, window_bounds = array<i64: 1, 32, 256>}]} {
    %c0 = arith.constant 0 : index
    %c0_0 = arith.constant 0 : index
    %c0_1 = arith.constant 0 : index
    %0 = vector.load %arg1[%c0, %c0_0, %c0_1] : memref<1x32x256xf32, #tpu.memory_space<vmem>>, vector<1x32x256xf32>
    %cst = arith.constant dense<0.000000e+00> : vector<1x32xf32>
    %1 = vector.multi_reduction <add>, %0, %cst [2] : vector<1x32x256xf32> to vector<1x32xf32>
    %2 = vector.shape_cast %1 : vector<1x32xf32> to vector<1x32x1xf32>
    %cst_2 = arith.constant 3.906250e-03 : f32
    %3 = vector.broadcast %cst_2 : f32 to vector<1x32x1xf32>
    %4 = arith.mulf %2, %3 : vector<1x32x1xf32>
    %c0_3 = arith.constant 0 : index
    %c0_4 = arith.constant 0 : index
    %5 = vector.load %arg2[%c0_3, %c0_4] : memref<32x2xf32, #tpu.memory_space<vmem>>, vector<32x2xf32>
    %6 = vector.shape_cast %5 : vector<32x2xf32> to vector<1x32x2xf32>
    %7 = vector.broadcast %4 : vector<1x32x1xf32> to vector<1x32x2xf32>
    %8 = arith.mulf %7, %6 : vector<1x32x2xf32>
    %cst_5 = arith.constant dense<0.000000e+00> : vector<1x2xf32>
    %9 = vector.multi_reduction <add>, %8, %cst_5 [1] : vector<1x32x2xf32> to vector<1x2xf32>
    %10 = vector.shape_cast %9 : vector<1x2xf32> to vector<1x1x2xf32>
    %c0_6 = arith.constant 0 : index
    %c0_7 = arith.constant 0 : index
    %11 = vector.load %arg3[%c0_6, %c0_7] : memref<1x2xf32, #tpu.memory_space<vmem>>, vector<1x2xf32>
    %12 = vector.shape_cast %11 : vector<1x2xf32> to vector<1x1x2xf32>
    %13 = arith.addf %10, %12 : vector<1x1x2xf32>
    %cst_8 = arith.constant 0.000000e+00 : f32
    %14 = vector.broadcast %cst_8 : f32 to vector<1x1x2xf32>
    %15 = arith.maximumf %13, %14 : vector<1x1x2xf32>
    %c0_9 = arith.constant 0 : index
    %c0_10 = arith.constant 0 : index
    %16 = vector.load %arg4[%c0_9, %c0_10] : memref<32x2xf32, #tpu.memory_space<vmem>>, vector<32x2xf32>
    %17 = vector.shape_cast %16 : vector<32x2xf32> to vector<1x32x2xf32>
    %18 = vector.broadcast %15 : vector<1x1x2xf32> to vector<1x32x2xf32>
    %19 = arith.mulf %18, %17 : vector<1x32x2xf32>
    %cst_11 = arith.constant dense<0.000000e+00> : vector<1x32xf32>
    %20 = vector.multi_reduction <add>, %19, %cst_11 [2] : vector<1x32x2xf32> to vector<1x32xf32>
    %21 = vector.shape_cast %20 : vector<1x32xf32> to vector<1x32x1xf32>
    %c0_12 = arith.constant 0 : index
    %c0_13 = arith.constant 0 : index
    %22 = vector.load %arg5[%c0_12, %c0_13] : memref<32x1xf32, #tpu.memory_space<vmem>>, vector<32x1xf32>
    %23 = vector.shape_cast %22 : vector<32x1xf32> to vector<1x32x1xf32>
    %24 = arith.addf %21, %23 : vector<1x32x1xf32>
    %25 = arith.negf %24 : vector<1x32x1xf32>
    %26 = math.exp %25 : vector<1x32x1xf32>
    %cst_14 = arith.constant 1.000000e+00 : f32
    %27 = vector.broadcast %cst_14 : f32 to vector<1x32x1xf32>
    %28 = arith.addf %27, %26 : vector<1x32x1xf32>
    %29 = arith.divf %27, %28 : vector<1x32x1xf32>
    %30 = vector.broadcast %29 : vector<1x32x1xf32> to vector<1x32x256xf32>
    %31 = arith.mulf %0, %30 : vector<1x32x256xf32>
    %c0_15 = arith.constant 0 : index
    %c0_16 = arith.constant 0 : index
    %c0_17 = arith.constant 0 : index
    %32 = vector.load %arg10[%c0_15, %c0_16, %c0_17] : memref<1x32x256xf32, #tpu.memory_space<vmem>>, vector<1x32x256xf32>
    tpu.vector_store %arg10[%c0_15, %c0_16, %c0_17], %31 {strides = array<i32>} : memref<1x32x256xf32, #tpu.memory_space<vmem>>, vector<1x32x256xf32>,
    %c0_18 = arith.constant 0 : index
    %c0_19 = arith.constant 0 : index
    %33 = vector.load %arg6[%c0_18, %c0_19] : memref<32x2xf32, #tpu.memory_space<vmem>>, vector<32x2xf32>
    %34 = vector.extract_strided_slice %33 {offsets = [0, 0], sizes = [32, 1], strides = [1, 1]} : vector<32x2xf32> to vector<32x1xf32>
    %35 = vector.shape_cast %34 : vector<32x1xf32> to vector<1x32x1xf32>
    %36 = vector.broadcast %35 : vector<1x32x1xf32> to vector<1x32x256xf32>
    %37 = arith.mulf %31, %36 : vector<1x32x256xf32>
    %cst_20 = arith.constant dense<0.000000e+00> : vector<1x256xf32>
    %38 = vector.multi_reduction <add>, %37, %cst_20 [1] : vector<1x32x256xf32> to vector<1x256xf32>
    %39 = vector.shape_cast %38 : vector<1x256xf32> to vector<1x1x256xf32>
    %40 = vector.extract_strided_slice %33 {offsets = [0, 1], sizes = [32, 1], strides = [1, 1]} : vector<32x2xf32> to vector<32x1xf32>
    %41 = vector.shape_cast %40 : vector<32x1xf32> to vector<1x32x1xf32>
    %42 = vector.broadcast %41 : vector<1x32x1xf32> to vector<1x32x256xf32>
    %43 = arith.mulf %31, %42 : vector<1x32x256xf32>
    %cst_21 = arith.constant dense<0.000000e+00> : vector<1x256xf32>
    %44 = vector.multi_reduction <add>, %43, %cst_21 [1] : vector<1x32x256xf32> to vector<1x256xf32>
    %45 = vector.shape_cast %44 : vector<1x256xf32> to vector<1x1x256xf32>
    %46 = tpu.concatenate %39, %45 in 1 : vector<1x1x256xf32>, vector<1x1x256xf32> -> vector<1x2x256xf32>
    %c0_22 = arith.constant 0 : index
    %c0_23 = arith.constant 0 : index
    %47 = vector.load %arg7[%c0_22, %c0_23] : memref<2x1xf32, #tpu.memory_space<vmem>>, vector<2x1xf32>
    %48 = vector.shape_cast %47 : vector<2x1xf32> to vector<1x2x1xf32>
    %49 = vector.broadcast %48 : vector<1x2x1xf32> to vector<1x2x256xf32>
    %50 = arith.addf %46, %49 : vector<1x2x256xf32>
    %cst_24 = arith.constant 0.000000e+00 : f32
    %51 = vector.broadcast %cst_24 : f32 to vector<1x2x256xf32>
    %52 = arith.maximumf %50, %51 : vector<1x2x256xf32>
    %53 = vector.shape_cast %52 : vector<1x2x256xf32> to vector<2x256xf32>
    %c0_25 = arith.constant 0 : index
    %c0_26 = arith.constant 0 : index
    %c0_27 = arith.constant 0 : index
    %54 = vector.load %arg8[%c0_25, %c0_26, %c0_27] : memref<49x2x256xf32, #tpu.memory_space<vmem>>, vector<1x2x256xf32>
    %55 = vector.shape_cast %54 : vector<1x2x256xf32> to vector<2x256xf32>
    %c51_i32 = arith.constant 51 : i32
    %56 = tpu.dynamic_rotate %53 by %c51_i32 dim 1 : vector<2x256xf32>, i32 -> vector<2x256xf32>
    %57 = arith.mulf %56, %55 : vector<2x256xf32>
    %c1 = arith.constant 1 : index
    %c0_28 = arith.constant 0 : index
    %c0_29 = arith.constant 0 : index
    %58 = vector.load %arg8[%c1, %c0_28, %c0_29] : memref<49x2x256xf32, #tpu.memory_space<vmem>>, vector<1x2x256xf32>
    %59 = vector.shape_cast %58 : vector<1x2x256xf32> to vector<2x256xf32>
    %c50_i32 = arith.constant 50 : i32
    %60 = tpu.dynamic_rotate %53 by %c50_i32 dim 1 : vector<2x256xf32>, i32 -> vector<2x256xf32>
    %61 = arith.mulf %60, %59 : vector<2x256xf32>
    %62 = arith.addf %57, %61 : vector<2x256xf32>
    %c2 = arith.constant 2 : index
    %c0_30 = arith.constant 0 : index
    %c0_31 = arith.constant 0 : index
    %63 = vector.load %arg8[%c2, %c0_30, %c0_31] : memref<49x2x256xf32, #tpu.memory_space<vmem>>, vector<1x2x256xf32>
    %64 = vector.shape_cast %63 : vector<1x2x256xf32> to vector<2x256xf32>
    %c49_i32 = arith.constant 49 : i32
    %65 = tpu.dynamic_rotate %53 by %c49_i32 dim 1 : vector<2x256xf32>, i32 -> vector<2x256xf32>
    %66 = arith.mulf %65, %64 : vector<2x256xf32>
    %67 = arith.addf %62, %66 : vector<2x256xf32>
    %c3 = arith.constant 3 : index
    %c0_32 = arith.constant 0 : index
    %c0_33 = arith.constant 0 : index
    %68 = vector.load %arg8[%c3, %c0_32, %c0_33] : memref<49x2x256xf32, #tpu.memory_space<vmem>>, vector<1x2x256xf32>
    %69 = vector.shape_cast %68 : vector<1x2x256xf32> to vector<2x256xf32>
    %c48_i32 = arith.constant 48 : i32
    %70 = tpu.dynamic_rotate %53 by %c48_i32 dim 1 : vector<2x256xf32>, i32 -> vector<2x256xf32>
    %71 = arith.mulf %70, %69 : vector<2x256xf32>
    %72 = arith.addf %67, %71 : vector<2x256xf32>
    %c4 = arith.constant 4 : index
    %c0_34 = arith.constant 0 : index
    %c0_35 = arith.constant 0 : index
    %73 = vector.load %arg8[%c4, %c0_34, %c0_35] : memref<49x2x256xf32, #tpu.memory_space<vmem>>, vector<1x2x256xf32>
    %74 = vector.shape_cast %73 : vector<1x2x256xf32> to vector<2x256xf32>
    %c47_i32 = arith.constant 47 : i32
    %75 = tpu.dynamic_rotate %53 by %c47_i32 dim 1 : vector<2x256xf32>, i32 -> vector<2x256xf32>
    %76 = arith.mulf %75, %74 : vector<2x256xf32>
    %77 = arith.addf %72, %76 : vector<2x256xf32>
    %c5 = arith.constant 5 : index
    %c0_36 = arith.constant 0 : index
    %c0_37 = arith.constant 0 : index
    %78 = vector.load %arg8[%c5, %c0_36, %c0_37] : memref<49x2x256xf32, #tpu.memory_space<vmem>>, vector<1x2x256xf32>
    %79 = vector.shape_cast %78 : vector<1x2x256xf32> to vector<2x256xf32>
    %c46_i32 = arith.constant 46 : i32
    %80 = tpu.dynamic_rotate %53 by %c46_i32 dim 1 : vector<2x256xf32>, i32 -> vector<2x256xf32>
    %81 = arith.mulf %80, %79 : vector<2x256xf32>
    %82 = arith.addf %77, %81 : vector<2x256xf32>
    %c6 = arith.constant 6 : index
    %c0_38 = arith.constant 0 : index
    %c0_39 = arith.constant 0 : index
    %83 = vector.load %arg8[%c6, %c0_38, %c0_39] : memref<49x2x256xf32, #tpu.memory_space<vmem>>, vector<1x2x256xf32>
    %84 = vector.shape_cast %83 : vector<1x2x256xf32> to vector<2x256xf32>
    %c45_i32 = arith.constant 45 : i32
    %85 = tpu.dynamic_rotate %53 by %c45_i32 dim 1 : vector<2x256xf32>, i32 -> vector<2x256xf32>
    %86 = arith.mulf %85, %84 : vector<2x256xf32>
    %87 = arith.addf %82, %86 : vector<2x256xf32>
    %c7 = arith.constant 7 : index
    %c0_40 = arith.constant 0 : index
    %c0_41 = arith.constant 0 : index
    %88 = vector.load %arg8[%c7, %c0_40, %c0_41] : memref<49x2x256xf32, #tpu.memory_space<vmem>>, vector<1x2x256xf32>
    %89 = vector.shape_cast %88 : vector<1x2x256xf32> to vector<2x256xf32>
    %c35_i32 = arith.constant 35 : i32
    %90 = tpu.dynamic_rotate %53 by %c35_i32 dim 1 : vector<2x256xf32>, i32 -> vector<2x256xf32>
    %91 = arith.mulf %90, %89 : vector<2x256xf32>
    %92 = arith.addf %87, %91 : vector<2x256xf32>
    %c8 = arith.constant 8 : index
    %c0_42 = arith.constant 0 : index
    %c0_43 = arith.constant 0 : index
    %93 = vector.load %arg8[%c8, %c0_42, %c0_43] : memref<49x2x256xf32, #tpu.memory_space<vmem>>, vector<1x2x256xf32>
    %94 = vector.shape_cast %93 : vector<1x2x256xf32> to vector<2x256xf32>
    %c34_i32 = arith.constant 34 : i32
    %95 = tpu.dynamic_rotate %53 by %c34_i32 dim 1 : vector<2x256xf32>, i32 -> vector<2x256xf32>
    %96 = arith.mulf %95, %94 : vector<2x256xf32>
    %97 = arith.addf %92, %96 : vector<2x256xf32>
    %c9 = arith.constant 9 : index
    %c0_44 = arith.constant 0 : index
    %c0_45 = arith.constant 0 : index
    %98 = vector.load %arg8[%c9, %c0_44, %c0_45] : memref<49x2x256xf32, #tpu.memory_space<vmem>>, vector<1x2x256xf32>
    %99 = vector.shape_cast %98 : vector<1x2x256xf32> to vector<2x256xf32>
    %c33_i32 = arith.constant 33 : i32
    %100 = tpu.dynamic_rotate %53 by %c33_i32 dim 1 : vector<2x256xf32>, i32 -> vector<2x256xf32>
    %101 = arith.mulf %100, %99 : vector<2x256xf32>
    %102 = arith.addf %97, %101 : vector<2x256xf32>
    %c10 = arith.constant 10 : index
    %c0_46 = arith.constant 0 : index
    %c0_47 = arith.constant 0 : index
    %103 = vector.load %arg8[%c10, %c0_46, %c0_47] : memref<49x2x256xf32, #tpu.memory_space<vmem>>, vector<1x2x256xf32>
    %104 = vector.shape_cast %103 : vector<1x2x256xf32> to vector<2x256xf32>
    %c32_i32 = arith.constant 32 : i32
    %105 = tpu.dynamic_rotate %53 by %c32_i32 dim 1 : vector<2x256xf32>, i32 -> vector<2x256xf32>
    %106 = arith.mulf %105, %104 : vector<2x256xf32>
    %107 = arith.addf %102, %106 : vector<2x256xf32>
    %c11 = arith.constant 11 : index
    %c0_48 = arith.constant 0 : index
    %c0_49 = arith.constant 0 : index
    %108 = vector.load %arg8[%c11, %c0_48, %c0_49] : memref<49x2x256xf32, #tpu.memory_space<vmem>>, vector<1x2x256xf32>
    %109 = vector.shape_cast %108 : vector<1x2x256xf32> to vector<2x256xf32>
    %c31_i32 = arith.constant 31 : i32
    %110 = tpu.dynamic_rotate %53 by %c31_i32 dim 1 : vector<2x256xf32>, i32 -> vector<2x256xf32>
    %111 = arith.mulf %110, %109 : vector<2x256xf32>
    %112 = arith.addf %107, %111 : vector<2x256xf32>
    %c12 = arith.constant 12 : index
    %c0_50 = arith.constant 0 : index
    %c0_51 = arith.constant 0 : index
    %113 = vector.load %arg8[%c12, %c0_50, %c0_51] : memref<49x2x256xf32, #tpu.memory_space<vmem>>, vector<1x2x256xf32>
    %114 = vector.shape_cast %113 : vector<1x2x256xf32> to vector<2x256xf32>
    %c30_i32 = arith.constant 30 : i32
    %115 = tpu.dynamic_rotate %53 by %c30_i32 dim 1 : vector<2x256xf32>, i32 -> vector<2x256xf32>
    %116 = arith.mulf %115, %114 : vector<2x256xf32>
    %117 = arith.addf %112, %116 : vector<2x256xf32>
    %c13 = arith.constant 13 : index
    %c0_52 = arith.constant 0 : index
    %c0_53 = arith.constant 0 : index
    %118 = vector.load %arg8[%c13, %c0_52, %c0_53] : memref<49x2x256xf32, #tpu.memory_space<vmem>>, vector<1x2x256xf32>
    %119 = vector.shape_cast %118 : vector<1x2x256xf32> to vector<2x256xf32>
    %c29_i32 = arith.constant 29 : i32
    %120 = tpu.dynamic_rotate %53 by %c29_i32 dim 1 : vector<2x256xf32>, i32 -> vector<2x256xf32>
    %121 = arith.mulf %120, %119 : vector<2x256xf32>
    %122 = arith.addf %117, %121 : vector<2x256xf32>
    %c14 = arith.constant 14 : index
    %c0_54 = arith.constant 0 : index
    %c0_55 = arith.constant 0 : index
    %123 = vector.load %arg8[%c14, %c0_54, %c0_55] : memref<49x2x256xf32, #tpu.memory_space<vmem>>, vector<1x2x256xf32>
    %124 = vector.shape_cast %123 : vector<1x2x256xf32> to vector<2x256xf32>
    %c19_i32 = arith.constant 19 : i32
    %125 = tpu.dynamic_rotate %53 by %c19_i32 dim 1 : vector<2x256xf32>, i32 -> vector<2x256xf32>
    %126 = arith.mulf %125, %124 : vector<2x256xf32>
    %127 = arith.addf %122, %126 : vector<2x256xf32>
    %c15 = arith.constant 15 : index
    %c0_56 = arith.constant 0 : index
    %c0_57 = arith.constant 0 : index
    %128 = vector.load %arg8[%c15, %c0_56, %c0_57] : memref<49x2x256xf32, #tpu.memory_space<vmem>>, vector<1x2x256xf32>
    %129 = vector.shape_cast %128 : vector<1x2x256xf32> to vector<2x256xf32>
    %c18_i32 = arith.constant 18 : i32
    %130 = tpu.dynamic_rotate %53 by %c18_i32 dim 1 : vector<2x256xf32>, i32 -> vector<2x256xf32>
    %131 = arith.mulf %130, %129 : vector<2x256xf32>
    %132 = arith.addf %127, %131 : vector<2x256xf32>
    %c16 = arith.constant 16 : index
    %c0_58 = arith.constant 0 : index
    %c0_59 = arith.constant 0 : index
    %133 = vector.load %arg8[%c16, %c0_58, %c0_59] : memref<49x2x256xf32, #tpu.memory_space<vmem>>, vector<1x2x256xf32>
    %134 = vector.shape_cast %133 : vector<1x2x256xf32> to vector<2x256xf32>
    %c17_i32 = arith.constant 17 : i32
    %135 = tpu.dynamic_rotate %53 by %c17_i32 dim 1 : vector<2x256xf32>, i32 -> vector<2x256xf32>
    %136 = arith.mulf %135, %134 : vector<2x256xf32>
    %137 = arith.addf %132, %136 : vector<2x256xf32>
    %c17 = arith.constant 17 : index
    %c0_60 = arith.constant 0 : index
    %c0_61 = arith.constant 0 : index
    %138 = vector.load %arg8[%c17, %c0_60, %c0_61] : memref<49x2x256xf32, #tpu.memory_space<vmem>>, vector<1x2x256xf32>
    %139 = vector.shape_cast %138 : vector<1x2x256xf32> to vector<2x256xf32>
    %c16_i32 = arith.constant 16 : i32
    %140 = tpu.dynamic_rotate %53 by %c16_i32 dim 1 : vector<2x256xf32>, i32 -> vector<2x256xf32>
    %141 = arith.mulf %140, %139 : vector<2x256xf32>
    %142 = arith.addf %137, %141 : vector<2x256xf32>
    %c18 = arith.constant 18 : index
    %c0_62 = arith.constant 0 : index
    %c0_63 = arith.constant 0 : index
    %143 = vector.load %arg8[%c18, %c0_62, %c0_63] : memref<49x2x256xf32, #tpu.memory_space<vmem>>, vector<1x2x256xf32>
    %144 = vector.shape_cast %143 : vector<1x2x256xf32> to vector<2x256xf32>
    %c15_i32 = arith.constant 15 : i32
    %145 = tpu.dynamic_rotate %53 by %c15_i32 dim 1 : vector<2x256xf32>, i32 -> vector<2x256xf32>
    %146 = arith.mulf %145, %144 : vector<2x256xf32>
    %147 = arith.addf %142, %146 : vector<2x256xf32>
    %c19 = arith.constant 19 : index
    %c0_64 = arith.constant 0 : index
    %c0_65 = arith.constant 0 : index
    %148 = vector.load %arg8[%c19, %c0_64, %c0_65] : memref<49x2x256xf32, #tpu.memory_space<vmem>>, vector<1x2x256xf32>
    %149 = vector.shape_cast %148 : vector<1x2x256xf32> to vector<2x256xf32>
    %c14_i32 = arith.constant 14 : i32
    %150 = tpu.dynamic_rotate %53 by %c14_i32 dim 1 : vector<2x256xf32>, i32 -> vector<2x256xf32>
    %151 = arith.mulf %150, %149 : vector<2x256xf32>
    %152 = arith.addf %147, %151 : vector<2x256xf32>
    %c20 = arith.constant 20 : index
    %c0_66 = arith.constant 0 : index
    %c0_67 = arith.constant 0 : index
    %153 = vector.load %arg8[%c20, %c0_66, %c0_67] : memref<49x2x256xf32, #tpu.memory_space<vmem>>, vector<1x2x256xf32>
    %154 = vector.shape_cast %153 : vector<1x2x256xf32> to vector<2x256xf32>
    %c13_i32 = arith.constant 13 : i32
    %155 = tpu.dynamic_rotate %53 by %c13_i32 dim 1 : vector<2x256xf32>, i32 -> vector<2x256xf32>
    %156 = arith.mulf %155, %154 : vector<2x256xf32>
    %157 = arith.addf %152, %156 : vector<2x256xf32>
    %c21 = arith.constant 21 : index
    %c0_68 = arith.constant 0 : index
    %c0_69 = arith.constant 0 : index
    %158 = vector.load %arg8[%c21, %c0_68, %c0_69] : memref<49x2x256xf32, #tpu.memory_space<vmem>>, vector<1x2x256xf32>
    %159 = vector.shape_cast %158 : vector<1x2x256xf32> to vector<2x256xf32>
    %c3_i32 = arith.constant 3 : i32
    %160 = tpu.dynamic_rotate %53 by %c3_i32 dim 1 : vector<2x256xf32>, i32 -> vector<2x256xf32>
    %161 = arith.mulf %160, %159 : vector<2x256xf32>
    %162 = arith.addf %157, %161 : vector<2x256xf32>
    %c22 = arith.constant 22 : index
    %c0_70 = arith.constant 0 : index
    %c0_71 = arith.constant 0 : index
    %163 = vector.load %arg8[%c22, %c0_70, %c0_71] : memref<49x2x256xf32, #tpu.memory_space<vmem>>, vector<1x2x256xf32>
    %164 = vector.shape_cast %163 : vector<1x2x256xf32> to vector<2x256xf32>
    %c2_i32 = arith.constant 2 : i32
    %165 = tpu.dynamic_rotate %53 by %c2_i32 dim 1 : vector<2x256xf32>, i32 -> vector<2x256xf32>
    %166 = arith.mulf %165, %164 : vector<2x256xf32>
    %167 = arith.addf %162, %166 : vector<2x256xf32>
    %c23 = arith.constant 23 : index
    %c0_72 = arith.constant 0 : index
    %c0_73 = arith.constant 0 : index
    %168 = vector.load %arg8[%c23, %c0_72, %c0_73] : memref<49x2x256xf32, #tpu.memory_space<vmem>>, vector<1x2x256xf32>
    %169 = vector.shape_cast %168 : vector<1x2x256xf32> to vector<2x256xf32>
    %c1_i32 = arith.constant 1 : i32
    %170 = tpu.dynamic_rotate %53 by %c1_i32 dim 1 : vector<2x256xf32>, i32 -> vector<2x256xf32>
    %171 = arith.mulf %170, %169 : vector<2x256xf32>
    %172 = arith.addf %167, %171 : vector<2x256xf32>
    %c24 = arith.constant 24 : index
    %c0_74 = arith.constant 0 : index
    %c0_75 = arith.constant 0 : index
    %173 = vector.load %arg8[%c24, %c0_74, %c0_75] : memref<49x2x256xf32, #tpu.memory_space<vmem>>, vector<1x2x256xf32>
    %174 = vector.shape_cast %173 : vector<1x2x256xf32> to vector<2x256xf32>
    %175 = arith.mulf %53, %174 : vector<2x256xf32>
    %176 = arith.addf %172, %175 : vector<2x256xf32>
    %c25 = arith.constant 25 : index
    %c0_76 = arith.constant 0 : index
    %c0_77 = arith.constant 0 : index
    %177 = vector.load %arg8[%c25, %c0_76, %c0_77] : memref<49x2x256xf32, #tpu.memory_space<vmem>>, vector<1x2x256xf32>
    %178 = vector.shape_cast %177 : vector<1x2x256xf32> to vector<2x256xf32>
    %c255_i32 = arith.constant 255 : i32
    %179 = tpu.dynamic_rotate %53 by %c255_i32 dim 1 : vector<2x256xf32>, i32 -> vector<2x256xf32>
    %180 = arith.mulf %179, %178 : vector<2x256xf32>
    %181 = arith.addf %176, %180 : vector<2x256xf32>
    %c26 = arith.constant 26 : index
    %c0_78 = arith.constant 0 : index
    %c0_79 = arith.constant 0 : index
    %182 = vector.load %arg8[%c26, %c0_78, %c0_79] : memref<49x2x256xf32, #tpu.memory_space<vmem>>, vector<1x2x256xf32>
    %183 = vector.shape_cast %182 : vector<1x2x256xf32> to vector<2x256xf32>
    %c254_i32 = arith.constant 254 : i32
    %184 = tpu.dynamic_rotate %53 by %c254_i32 dim 1 : vector<2x256xf32>, i32 -> vector<2x256xf32>
    %185 = arith.mulf %184, %183 : vector<2x256xf32>
    %186 = arith.addf %181, %185 : vector<2x256xf32>
    %c27 = arith.constant 27 : index
    %c0_80 = arith.constant 0 : index
    %c0_81 = arith.constant 0 : index
    %187 = vector.load %arg8[%c27, %c0_80, %c0_81] : memref<49x2x256xf32, #tpu.memory_space<vmem>>, vector<1x2x256xf32>
    %188 = vector.shape_cast %187 : vector<1x2x256xf32> to vector<2x256xf32>
    %c253_i32 = arith.constant 253 : i32
    %189 = tpu.dynamic_rotate %53 by %c253_i32 dim 1 : vector<2x256xf32>, i32 -> vector<2x256xf32>
    %190 = arith.mulf %189, %188 : vector<2x256xf32>
    %191 = arith.addf %186, %190 : vector<2x256xf32>
    %c28 = arith.constant 28 : index
    %c0_82 = arith.constant 0 : index
    %c0_83 = arith.constant 0 : index
    %192 = vector.load %arg8[%c28, %c0_82, %c0_83] : memref<49x2x256xf32, #tpu.memory_space<vmem>>, vector<1x2x256xf32>
    %193 = vector.shape_cast %192 : vector<1x2x256xf32> to vector<2x256xf32>
    %c243_i32 = arith.constant 243 : i32
    %194 = tpu.dynamic_rotate %53 by %c243_i32 dim 1 : vector<2x256xf32>, i32 -> vector<2x256xf32>
    %195 = arith.mulf %194, %193 : vector<2x256xf32>
    %196 = arith.addf %191, %195 : vector<2x256xf32>
    %c29 = arith.constant 29 : index
    %c0_84 = arith.constant 0 : index
    %c0_85 = arith.constant 0 : index
    %197 = vector.load %arg8[%c29, %c0_84, %c0_85] : memref<49x2x256xf32, #tpu.memory_space<vmem>>, vector<1x2x256xf32>
    %198 = vector.shape_cast %197 : vector<1x2x256xf32> to vector<2x256xf32>
    %c242_i32 = arith.constant 242 : i32
    %199 = tpu.dynamic_rotate %53 by %c242_i32 dim 1 : vector<2x256xf32>, i32 -> vector<2x256xf32>
    %200 = arith.mulf %199, %198 : vector<2x256xf32>
    %201 = arith.addf %196, %200 : vector<2x256xf32>
    %c30 = arith.constant 30 : index
    %c0_86 = arith.constant 0 : index
    %c0_87 = arith.constant 0 : index
    %202 = vector.load %arg8[%c30, %c0_86, %c0_87] : memref<49x2x256xf32, #tpu.memory_space<vmem>>, vector<1x2x256xf32>
    %203 = vector.shape_cast %202 : vector<1x2x256xf32> to vector<2x256xf32>
    %c241_i32 = arith.constant 241 : i32
    %204 = tpu.dynamic_rotate %53 by %c241_i32 dim 1 : vector<2x256xf32>, i32 -> vector<2x256xf32>
    %205 = arith.mulf %204, %203 : vector<2x256xf32>
    %206 = arith.addf %201, %205 : vector<2x256xf32>
    %c31 = arith.constant 31 : index
    %c0_88 = arith.constant 0 : index
    %c0_89 = arith.constant 0 : index
    %207 = vector.load %arg8[%c31, %c0_88, %c0_89] : memref<49x2x256xf32, #tpu.memory_space<vmem>>, vector<1x2x256xf32>
    %208 = vector.shape_cast %207 : vector<1x2x256xf32> to vector<2x256xf32>
    %c240_i32 = arith.constant 240 : i32
    %209 = tpu.dynamic_rotate %53 by %c240_i32 dim 1 : vector<2x256xf32>, i32 -> vector<2x256xf32>
    %210 = arith.mulf %209, %208 : vector<2x256xf32>
    %211 = arith.addf %206, %210 : vector<2x256xf32>
    %c32 = arith.constant 32 : index
    %c0_90 = arith.constant 0 : index
    %c0_91 = arith.constant 0 : index
    %212 = vector.load %arg8[%c32, %c0_90, %c0_91] : memref<49x2x256xf32, #tpu.memory_space<vmem>>, vector<1x2x256xf32>
    %213 = vector.shape_cast %212 : vector<1x2x256xf32> to vector<2x256xf32>
    %c239_i32 = arith.constant 239 : i32
    %214 = tpu.dynamic_rotate %53 by %c239_i32 dim 1 : vector<2x256xf32>, i32 -> vector<2x256xf32>
    %215 = arith.mulf %214, %213 : vector<2x256xf32>
    %216 = arith.addf %211, %215 : vector<2x256xf32>
    %c33 = arith.constant 33 : index
    %c0_92 = arith.constant 0 : index
    %c0_93 = arith.constant 0 : index
    %217 = vector.load %arg8[%c33, %c0_92, %c0_93] : memref<49x2x256xf32, #tpu.memory_space<vmem>>, vector<1x2x256xf32>
    %218 = vector.shape_cast %217 : vector<1x2x256xf32> to vector<2x256xf32>
    %c238_i32 = arith.constant 238 : i32
    %219 = tpu.dynamic_rotate %53 by %c238_i32 dim 1 : vector<2x256xf32>, i32 -> vector<2x256xf32>
    %220 = arith.mulf %219, %218 : vector<2x256xf32>
    %221 = arith.addf %216, %220 : vector<2x256xf32>
    %c34 = arith.constant 34 : index
    %c0_94 = arith.constant 0 : index
    %c0_95 = arith.constant 0 : index
    %222 = vector.load %arg8[%c34, %c0_94, %c0_95] : memref<49x2x256xf32, #tpu.memory_space<vmem>>, vector<1x2x256xf32>
    %223 = vector.shape_cast %222 : vector<1x2x256xf32> to vector<2x256xf32>
    %c237_i32 = arith.constant 237 : i32
    %224 = tpu.dynamic_rotate %53 by %c237_i32 dim 1 : vector<2x256xf32>, i32 -> vector<2x256xf32>
    %225 = arith.mulf %224, %223 : vector<2x256xf32>
    %226 = arith.addf %221, %225 : vector<2x256xf32>
    %c35 = arith.constant 35 : index
    %c0_96 = arith.constant 0 : index
    %c0_97 = arith.constant 0 : index
    %227 = vector.load %arg8[%c35, %c0_96, %c0_97] : memref<49x2x256xf32, #tpu.memory_space<vmem>>, vector<1x2x256xf32>
    %228 = vector.shape_cast %227 : vector<1x2x256xf32> to vector<2x256xf32>
    %c227_i32 = arith.constant 227 : i32
    %229 = tpu.dynamic_rotate %53 by %c227_i32 dim 1 : vector<2x256xf32>, i32 -> vector<2x256xf32>
    %230 = arith.mulf %229, %228 : vector<2x256xf32>
    %231 = arith.addf %226, %230 : vector<2x256xf32>
    %c36 = arith.constant 36 : index
    %c0_98 = arith.constant 0 : index
    %c0_99 = arith.constant 0 : index
    %232 = vector.load %arg8[%c36, %c0_98, %c0_99] : memref<49x2x256xf32, #tpu.memory_space<vmem>>, vector<1x2x256xf32>
    %233 = vector.shape_cast %232 : vector<1x2x256xf32> to vector<2x256xf32>
    %c226_i32 = arith.constant 226 : i32
    %234 = tpu.dynamic_rotate %53 by %c226_i32 dim 1 : vector<2x256xf32>, i32 -> vector<2x256xf32>
    %235 = arith.mulf %234, %233 : vector<2x256xf32>
    %236 = arith.addf %231, %235 : vector<2x256xf32>
    %c37 = arith.constant 37 : index
    %c0_100 = arith.constant 0 : index
    %c0_101 = arith.constant 0 : index
    %237 = vector.load %arg8[%c37, %c0_100, %c0_101] : memref<49x2x256xf32, #tpu.memory_space<vmem>>, vector<1x2x256xf32>
    %238 = vector.shape_cast %237 : vector<1x2x256xf32> to vector<2x256xf32>
    %c225_i32 = arith.constant 225 : i32
    %239 = tpu.dynamic_rotate %53 by %c225_i32 dim 1 : vector<2x256xf32>, i32 -> vector<2x256xf32>
    %240 = arith.mulf %239, %238 : vector<2x256xf32>
    %241 = arith.addf %236, %240 : vector<2x256xf32>
    %c38 = arith.constant 38 : index
    %c0_102 = arith.constant 0 : index
    %c0_103 = arith.constant 0 : index
    %242 = vector.load %arg8[%c38, %c0_102, %c0_103] : memref<49x2x256xf32, #tpu.memory_space<vmem>>, vector<1x2x256xf32>
    %243 = vector.shape_cast %242 : vector<1x2x256xf32> to vector<2x256xf32>
    %c224_i32 = arith.constant 224 : i32
    %244 = tpu.dynamic_rotate %53 by %c224_i32 dim 1 : vector<2x256xf32>, i32 -> vector<2x256xf32>
    %245 = arith.mulf %244, %243 : vector<2x256xf32>
    %246 = arith.addf %241, %245 : vector<2x256xf32>
    %c39 = arith.constant 39 : index
    %c0_104 = arith.constant 0 : index
    %c0_105 = arith.constant 0 : index
    %247 = vector.load %arg8[%c39, %c0_104, %c0_105] : memref<49x2x256xf32, #tpu.memory_space<vmem>>, vector<1x2x256xf32>
    %248 = vector.shape_cast %247 : vector<1x2x256xf32> to vector<2x256xf32>
    %c223_i32 = arith.constant 223 : i32
    %249 = tpu.dynamic_rotate %53 by %c223_i32 dim 1 : vector<2x256xf32>, i32 -> vector<2x256xf32>
    %250 = arith.mulf %249, %248 : vector<2x256xf32>
    %251 = arith.addf %246, %250 : vector<2x256xf32>
    %c40 = arith.constant 40 : index
    %c0_106 = arith.constant 0 : index
    %c0_107 = arith.constant 0 : index
    %252 = vector.load %arg8[%c40, %c0_106, %c0_107] : memref<49x2x256xf32, #tpu.memory_space<vmem>>, vector<1x2x256xf32>
    %253 = vector.shape_cast %252 : vector<1x2x256xf32> to vector<2x256xf32>
    %c222_i32 = arith.constant 222 : i32
    %254 = tpu.dynamic_rotate %53 by %c222_i32 dim 1 : vector<2x256xf32>, i32 -> vector<2x256xf32>
    %255 = arith.mulf %254, %253 : vector<2x256xf32>
    %256 = arith.addf %251, %255 : vector<2x256xf32>
    %c41 = arith.constant 41 : index
    %c0_108 = arith.constant 0 : index
    %c0_109 = arith.constant 0 : index
    %257 = vector.load %arg8[%c41, %c0_108, %c0_109] : memref<49x2x256xf32, #tpu.memory_space<vmem>>, vector<1x2x256xf32>
    %258 = vector.shape_cast %257 : vector<1x2x256xf32> to vector<2x256xf32>
    %c221_i32 = arith.constant 221 : i32
    %259 = tpu.dynamic_rotate %53 by %c221_i32 dim 1 : vector<2x256xf32>, i32 -> vector<2x256xf32>
    %260 = arith.mulf %259, %258 : vector<2x256xf32>
    %261 = arith.addf %256, %260 : vector<2x256xf32>
    %c42 = arith.constant 42 : index
    %c0_110 = arith.constant 0 : index
    %c0_111 = arith.constant 0 : index
    %262 = vector.load %arg8[%c42, %c0_110, %c0_111] : memref<49x2x256xf32, #tpu.memory_space<vmem>>, vector<1x2x256xf32>
    %263 = vector.shape_cast %262 : vector<1x2x256xf32> to vector<2x256xf32>
    %c211_i32 = arith.constant 211 : i32
    %264 = tpu.dynamic_rotate %53 by %c211_i32 dim 1 : vector<2x256xf32>, i32 -> vector<2x256xf32>
    %265 = arith.mulf %264, %263 : vector<2x256xf32>
    %266 = arith.addf %261, %265 : vector<2x256xf32>
    %c43 = arith.constant 43 : index
    %c0_112 = arith.constant 0 : index
    %c0_113 = arith.constant 0 : index
    %267 = vector.load %arg8[%c43, %c0_112, %c0_113] : memref<49x2x256xf32, #tpu.memory_space<vmem>>, vector<1x2x256xf32>
    %268 = vector.shape_cast %267 : vector<1x2x256xf32> to vector<2x256xf32>
    %c210_i32 = arith.constant 210 : i32
    %269 = tpu.dynamic_rotate %53 by %c210_i32 dim 1 : vector<2x256xf32>, i32 -> vector<2x256xf32>
    %270 = arith.mulf %269, %268 : vector<2x256xf32>
    %271 = arith.addf %266, %270 : vector<2x256xf32>
    %c44 = arith.constant 44 : index
    %c0_114 = arith.constant 0 : index
    %c0_115 = arith.constant 0 : index
    %272 = vector.load %arg8[%c44, %c0_114, %c0_115] : memref<49x2x256xf32, #tpu.memory_space<vmem>>, vector<1x2x256xf32>
    %273 = vector.shape_cast %272 : vector<1x2x256xf32> to vector<2x256xf32>
    %c209_i32 = arith.constant 209 : i32
    %274 = tpu.dynamic_rotate %53 by %c209_i32 dim 1 : vector<2x256xf32>, i32 -> vector<2x256xf32>
    %275 = arith.mulf %274, %273 : vector<2x256xf32>
    %276 = arith.addf %271, %275 : vector<2x256xf32>
    %c45 = arith.constant 45 : index
    %c0_116 = arith.constant 0 : index
    %c0_117 = arith.constant 0 : index
    %277 = vector.load %arg8[%c45, %c0_116, %c0_117] : memref<49x2x256xf32, #tpu.memory_space<vmem>>, vector<1x2x256xf32>
    %278 = vector.shape_cast %277 : vector<1x2x256xf32> to vector<2x256xf32>
    %c208_i32 = arith.constant 208 : i32
    %279 = tpu.dynamic_rotate %53 by %c208_i32 dim 1 : vector<2x256xf32>, i32 -> vector<2x256xf32>
    %280 = arith.mulf %279, %278 : vector<2x256xf32>
    %281 = arith.addf %276, %280 : vector<2x256xf32>
    %c46 = arith.constant 46 : index
    %c0_118 = arith.constant 0 : index
    %c0_119 = arith.constant 0 : index
    %282 = vector.load %arg8[%c46, %c0_118, %c0_119] : memref<49x2x256xf32, #tpu.memory_space<vmem>>, vector<1x2x256xf32>
    %283 = vector.shape_cast %282 : vector<1x2x256xf32> to vector<2x256xf32>
    %c207_i32 = arith.constant 207 : i32
    %284 = tpu.dynamic_rotate %53 by %c207_i32 dim 1 : vector<2x256xf32>, i32 -> vector<2x256xf32>
    %285 = arith.mulf %284, %283 : vector<2x256xf32>
    %286 = arith.addf %281, %285 : vector<2x256xf32>
    %c47 = arith.constant 47 : index
    %c0_120 = arith.constant 0 : index
    %c0_121 = arith.constant 0 : index
    %287 = vector.load %arg8[%c47, %c0_120, %c0_121] : memref<49x2x256xf32, #tpu.memory_space<vmem>>, vector<1x2x256xf32>
    %288 = vector.shape_cast %287 : vector<1x2x256xf32> to vector<2x256xf32>
    %c206_i32 = arith.constant 206 : i32
    %289 = tpu.dynamic_rotate %53 by %c206_i32 dim 1 : vector<2x256xf32>, i32 -> vector<2x256xf32>
    %290 = arith.mulf %289, %288 : vector<2x256xf32>
    %291 = arith.addf %286, %290 : vector<2x256xf32>
    %c48 = arith.constant 48 : index
    %c0_122 = arith.constant 0 : index
    %c0_123 = arith.constant 0 : index
    %292 = vector.load %arg8[%c48, %c0_122, %c0_123] : memref<49x2x256xf32, #tpu.memory_space<vmem>>, vector<1x2x256xf32>
    %293 = vector.shape_cast %292 : vector<1x2x256xf32> to vector<2x256xf32>
    %c205_i32 = arith.constant 205 : i32
    %294 = tpu.dynamic_rotate %53 by %c205_i32 dim 1 : vector<2x256xf32>, i32 -> vector<2x256xf32>
    %295 = arith.mulf %294, %293 : vector<2x256xf32>
    %296 = arith.addf %291, %295 : vector<2x256xf32>
    %c0_124 = arith.constant 0 : index
    %c0_125 = arith.constant 0 : index
    %297 = vector.load %arg9[%c0_124, %c0_125] : memref<1x1xf32, #tpu.memory_space<vmem>>, vector<1x1xf32>
    %cst_126 = arith.constant dense<0.000000e+00> : vector<256xf32>
    %298 = vector.multi_reduction <add>, %296, %cst_126 [0] : vector<2x256xf32> to vector<256xf32>
    %299 = vector.shape_cast %298 : vector<256xf32> to vector<1x256xf32>
    %300 = vector.broadcast %297 : vector<1x1xf32> to vector<1x256xf32>
    %301 = arith.addf %299, %300 : vector<1x256xf32>
    %302 = arith.negf %301 : vector<1x256xf32>
    %303 = math.exp %302 : vector<1x256xf32>
    %cst_127 = arith.constant 1.000000e+00 : f32
    %304 = vector.broadcast %cst_127 : f32 to vector<1x256xf32>
    %305 = arith.addf %304, %303 : vector<1x256xf32>
    %306 = arith.divf %304, %305 : vector<1x256xf32>
    %c0_128 = arith.constant 0 : index
    %c0_129 = arith.constant 0 : index
    %c0_130 = arith.constant 0 : index
    %307 = vector.load %arg10[%c0_128, %c0_129, %c0_130] : memref<1x32x256xf32, #tpu.memory_space<vmem>>, vector<1x32x256xf32>
    %308 = vector.shape_cast %307 : vector<1x32x256xf32> to vector<32x256xf32>
    %309 = vector.broadcast %306 : vector<1x256xf32> to vector<32x256xf32>
    %310 = arith.mulf %308, %309 : vector<32x256xf32>
    %c0_131 = arith.constant 0 : index
    %c0_132 = arith.constant 0 : index
    %c0_133 = arith.constant 0 : index
    %311 = vector.load %arg10[%c0_131, %c0_132, %c0_133] : memref<1x32x256xf32, #tpu.memory_space<vmem>>, vector<1x32x256xf32>
    %312 = vector.shape_cast %311 : vector<1x32x256xf32> to vector<32x256xf32>
    %313 = vector.shape_cast %310 : vector<32x256xf32> to vector<1x32x256xf32>
    tpu.vector_store %arg10[%c0_131, %c0_132, %c0_133], %313 {strides = array<i32>} : memref<1x32x256xf32, #tpu.memory_space<vmem>>, vector<1x32x256xf32>,
    return
  }
  func.func @transform_0(%arg0: i32) -> (i32, i32, i32) {
    %c0_i32 = arith.constant 0 : i32
    %c0_i32_0 = arith.constant 0 : i32
    %c0_i32_1 = arith.constant 0 : i32
    return %arg0, %c0_i32, %c0_i32_0 : i32, i32, i32
  }
  func.func @transform_1(%arg0: i32) -> (i32, i32) {
    %c0_i32 = arith.constant 0 : i32
    %c0_i32_0 = arith.constant 0 : i32
    %c0_i32_1 = arith.constant 0 : i32
    return %c0_i32, %c0_i32_0 : i32, i32
  }
  func.func @transform_2(%arg0: i32) -> (i32, i32) {
    %c0_i32 = arith.constant 0 : i32
    %c0_i32_0 = arith.constant 0 : i32
    %c0_i32_1 = arith.constant 0 : i32
    return %c0_i32, %c0_i32_0 : i32, i32
  }
  func.func @transform_3(%arg0: i32) -> (i32, i32) {
    %c0_i32 = arith.constant 0 : i32
    %c0_i32_0 = arith.constant 0 : i32
    %c0_i32_1 = arith.constant 0 : i32
    return %c0_i32, %c0_i32_0 : i32, i32
  }
  func.func @transform_4(%arg0: i32) -> (i32, i32) {
    %c0_i32 = arith.constant 0 : i32
    %c0_i32_0 = arith.constant 0 : i32
    %c0_i32_1 = arith.constant 0 : i32
    return %c0_i32, %c0_i32_0 : i32, i32
  }
  func.func @transform_5(%arg0: i32) -> (i32, i32) {
    %c0_i32 = arith.constant 0 : i32
    %c0_i32_0 = arith.constant 0 : i32
    %c0_i32_1 = arith.constant 0 : i32
    return %c0_i32, %c0_i32_0 : i32, i32
  }
  func.func @transform_6(%arg0: i32) -> (i32, i32) {
    %c0_i32 = arith.constant 0 : i32
    %c0_i32_0 = arith.constant 0 : i32
    %c0_i32_1 = arith.constant 0 : i32
    return %c0_i32, %c0_i32_0 : i32, i32
  }
  func.func @transform_7(%arg0: i32) -> (i32, i32, i32) {
    %c0_i32 = arith.constant 0 : i32
    %c0_i32_0 = arith.constant 0 : i32
    %c0_i32_1 = arith.constant 0 : i32
    %c0_i32_2 = arith.constant 0 : i32
    return %c0_i32, %c0_i32_0, %c0_i32_1 : i32, i32, i32
  }
  func.func @transform_8(%arg0: i32) -> (i32, i32) {
    %c0_i32 = arith.constant 0 : i32
    %c0_i32_0 = arith.constant 0 : i32
    %c0_i32_1 = arith.constant 0 : i32
    return %c0_i32, %c0_i32_0 : i32, i32
  }
  func.func @transform_9(%arg0: i32) -> (i32, i32, i32) {
    %c0_i32 = arith.constant 0 : i32
    %c0_i32_0 = arith.constant 0 : i32
    %c0_i32_1 = arith.constant 0 : i32
    return %arg0, %c0_i32, %c0_i32_0 : i32, i32, i32
  }
}

</mosaic_0001>

<llo_original>
// kernel: tpu_custom_call.1
$region0: #{tpu_custom_call.1}
  #allocation0 [shape = 'u32[]', space=smem, size = 0x4, offset = 0x4, fixed_abs, tag = 'smem constant byte address 0x4 - core index']
  #allocation1 [shape = 'u32[144,128]{1,0:T(1,128)}', space=vmem, size = 0x12000, scoped, tag = 'internal scratch']
  #allocation2 [shape = 'f32[1,1]{1,0:T(1,128)S(1)}', space=vmem, size = 0x200, scoped, tag = 'scoped memory for tpu_custom_call.1']
  %s0 = inlined_call_operand.vmem [shape: f32[2,32,256], index: 0, kind: input, shape index: {}]
  %s1 = inlined_call_operand.vmem [shape: f32[32,2], index: 1, kind: input, shape index: {}]
  %s2 = inlined_call_operand.vmem [shape: f32[1,2], index: 2, kind: input, shape index: {}]
  %s3 = inlined_call_operand.vmem [shape: f32[32,2], index: 3, kind: input, shape index: {}]
  %s4 = inlined_call_operand.vmem [shape: f32[32,1], index: 4, kind: input, shape index: {}]
  %s5 = inlined_call_operand.vmem [shape: f32[32,2], index: 5, kind: input, shape index: {}]
  %s6 = inlined_call_operand.vmem [shape: f32[2,1], index: 6, kind: input, shape index: {}]
  %s7 = inlined_call_operand.hbm [shape: f32[49,2,256], index: 7, kind: input, shape index: {}]
  %s8 = inlined_call_operand.<no memory space> [shape: f32[1,1], index: 8, kind: input, shape index: {}]
  %s9 = inlined_call_operand.hbm [shape: f32[2,32,256], index: 9, kind: output, shape index: {}]
  %s10 = sld [smem:[#allocation0]]
  $region73: #{tpu_custom_call.1} parent=0
    _
  %s12 = ssub.s32 1, %s10
  %s13 = scalar_select 0, %s12, %s10
  %v14 = vstv %s8
  %15 = vst [vmem:[#allocation2] sm:$0x1] %v14
  $region1: #{tpu_custom_call.1} parent=0
    #allocation3 [shape = 'u8[100352]{0}', space=vmem, size = 0x18800, scoped, tag = 'input window, operand 7, single buffered']
    #allocation4 [shape = 's32[2]{0}', space=sflag, size = 0x8, scoped, tag = 'scoped memory for tpu_custom_call.1']
    #allocation5 [shape = 's32[2]{0}', space=sflag, size = 0x8, scoped, tag = 'scoped memory for tpu_custom_call.1']
    #allocation6 [shape = 'u8[65536]{0}', space=vmem, size = 0x10000, scoped, tag = 'output window, operand 0']
    %16 = vsyncpa [#allocation4], 0
    %17 = vsyncpa [#allocation5], 0
    %s18 = scalar_lea.sflag [#allocation5], 1
    %19 = vsyncpa %s18, 0
    loop: start=0, step=1, limit=4
    $region2: #{tpu_custom_call.1} parent=1 // loop_pre_header
      _
    $region3: #{tpu_custom_call.1} parent=1 // loop_header
      %s21 = sphi 0, %s25
      %p22 = scmp.ge.s32.totalorder %s21, 4
      %s31 = sphi 0, %s33
      %s34 = sphi 0, %s31
      %s35 = sphi 0, %s34
      %s51 = sphi 0, %s35
      %s55 = sphi 0, %s55
      %s57 = sphi 0, %s55
      %s58 = sphi 0, %s57
      %s72 = sphi 0, %s58
      %s76 = sphi 0, %s76
      %s78 = sphi 0, %s76
      %s79 = sphi 0, %s78
      %s93 = sphi 0, %s79
      %s97 = sphi 0, %s97
      %s99 = sphi 0, %s97
      %s100 = sphi 0, %s99
      %s114 = sphi 0, %s100
      %s118 = sphi 0, %s118
      %s120 = sphi 0, %s118
      %s121 = sphi 0, %s120
      %s135 = sphi 0, %s121
      %s139 = sphi 0, %s139
      %s141 = sphi 0, %s139
      %s142 = sphi 0, %s141
      %s156 = sphi 0, %s142
      %s160 = sphi 0, %s160
      %s162 = sphi 0, %s160
      %s163 = sphi 0, %s162
      %s177 = sphi 0, %s163
      %s181 = sphi 0, %s181
      %s183 = sphi 0, %s181
      %s184 = sphi 0, %s183
      %s198 = sphi 0, %s184
      %s202 = sphi 0, %s202
      %s204 = sphi 0, %s202
      %s205 = sphi 0, %s204
      %s219 = sphi 0, %s205
      %s225 = sphi 0, %s227
      %s228 = sphi 0, %s225
      %s229 = sphi 0, %s228
      %s245 = sphi 0, %s229
    $region4: #{tpu_custom_call.1} parent=1 // loop_header_branch
      %24 = sbr.rel (%p22) target = $region8
    $region5: #{tpu_custom_call.1} parent=1 // loop_body
      %s26 = ssub.s32 %s21, 1
      %s27 = ssub.s32 %s21, 2
      %s28 = sadd.s32 %s21, 1
      %s29 = ssub.s32 %s21, %s28
      %p30 = scmp.eq.s32.totalorder %s29, 0
      %s32 = sadd.s32 %s31, 1
      %s33 = scalar_select %p30, %s31, %s32
      %p36 = pneg %p30
      %p37 = scmp.eq.s32.totalorder %s21, 1
      %p38 = por %p36, %p37
      %p39 = scmp.ne.s32.totalorder %s31, %s34
      %p40 = scmp.eq.s32.totalorder %s21, 0
      %p41 = por %p39, %p40
      %p42 = scmp.ne.s32.totalorder %s31, %s34
      %p43 = scmp.eq.s32.totalorder %s26, 1
      %p44 = por %p42, %p43
      %p45 = scmp.ne.s32.totalorder %s34, %s35
      %p46 = scmp.eq.s32.totalorder %s26, 0
      %p47 = por %p45, %p46
      %p48 = scmp.ne.s32.totalorder %s34, %s35
      %p49 = scmp.eq.s32.totalorder %s27, 1
      %p50 = por %p48, %p49
      %p52 = scmp.ne.s32.totalorder %s35, %s51
      %p53 = scmp.eq.s32.totalorder %s27, 0
      %p54 = por %p52, %p53
      %s56 = sadd.s32 %s55, 1
      %p59 = scmp.eq.s32.totalorder %s21, 1
      %p60 = scmp.ne.s32.totalorder %s55, %s57
      %p61 = scmp.eq.s32.totalorder %s21, 0
      %p62 = por %p60, %p61
      %p63 = scmp.ne.s32.totalorder %s55, %s57
      %p64 = scmp.eq.s32.totalorder %s26, 1
      %p65 = por %p63, %p64
      %p66 = scmp.ne.s32.totalorder %s57, %s58
      %p67 = scmp.eq.s32.totalorder %s26, 0
      %p68 = por %p66, %p67
      %p69 = scmp.ne.s32.totalorder %s57, %s58
      %p70 = scmp.eq.s32.totalorder %s27, 1
      %p71 = por %p69, %p70
      %p73 = scmp.ne.s32.totalorder %s58, %s72
      %p74 = scmp.eq.s32.totalorder %s27, 0
      %p75 = por %p73, %p74
      %s77 = sadd.s32 %s76, 1
      %p80 = scmp.eq.s32.totalorder %s21, 1
      %p81 = scmp.ne.s32.totalorder %s76, %s78
      %p82 = scmp.eq.s32.totalorder %s21, 0
      %p83 = por %p81, %p82
      %p84 = scmp.ne.s32.totalorder %s76, %s78
      %p85 = scmp.eq.s32.totalorder %s26, 1
      %p86 = por %p84, %p85
      %p87 = scmp.ne.s32.totalorder %s78, %s79
      %p88 = scmp.eq.s32.totalorder %s26, 0
      %p89 = por %p87, %p88
      %p90 = scmp.ne.s32.totalorder %s78, %s79
      %p91 = scmp.eq.s32.totalorder %s27, 1
      %p92 = por %p90, %p91
      %p94 = scmp.ne.s32.totalorder %s79, %s93
      %p95 = scmp.eq.s32.totalorder %s27, 0
      %p96 = por %p94, %p95
      %s98 = sadd.s32 %s97, 1
      %p101 = scmp.eq.s32.totalorder %s21, 1
      %p102 = scmp.ne.s32.totalorder %s97, %s99
      %p103 = scmp.eq.s32.totalorder %s21, 0
      %p104 = por %p102, %p103
      %p105 = scmp.ne.s32.totalorder %s97, %s99
      %p106 = scmp.eq.s32.totalorder %s26, 1
      %p107 = por %p105, %p106
      %p108 = scmp.ne.s32.totalorder %s99, %s100
      %p109 = scmp.eq.s32.totalorder %s26, 0
      %p110 = por %p108, %p109
      %p111 = scmp.ne.s32.totalorder %s99, %s100
      %p112 = scmp.eq.s32.totalorder %s27, 1
      %p113 = por %p111, %p112
      %p115 = scmp.ne.s32.totalorder %s100, %s114
      %p116 = scmp.eq.s32.totalorder %s27, 0
      %p117 = por %p115, %p116
      %s119 = sadd.s32 %s118, 1
      %p122 = scmp.eq.s32.totalorder %s21, 1
      %p123 = scmp.ne.s32.totalorder %s118, %s120
      %p124 = scmp.eq.s32.totalorder %s21, 0
      %p125 = por %p123, %p124
      %p126 = scmp.ne.s32.totalorder %s118, %s120
      %p127 = scmp.eq.s32.totalorder %s26, 1
      %p128 = por %p126, %p127
      %p129 = scmp.ne.s32.totalorder %s120, %s121
      %p130 = scmp.eq.s32.totalorder %s26, 0
      %p131 = por %p129, %p130
      %p132 = scmp.ne.s32.totalorder %s120, %s121
      %p133 = scmp.eq.s32.totalorder %s27, 1
      %p134 = por %p132, %p133
      %p136 = scmp.ne.s32.totalorder %s121, %s135
      %p137 = scmp.eq.s32.totalorder %s27, 0
      %p138 = por %p136, %p137
      %s140 = sadd.s32 %s139, 1
      %p143 = scmp.eq.s32.totalorder %s21, 1
      %p144 = scmp.ne.s32.totalorder %s139, %s141
      %p145 = scmp.eq.s32.totalorder %s21, 0
      %p146 = por %p144, %p145
      %p147 = scmp.ne.s32.totalorder %s139, %s141
      %p148 = scmp.eq.s32.totalorder %s26, 1
      %p149 = por %p147, %p148
      %p150 = scmp.ne.s32.totalorder %s141, %s142
      %p151 = scmp.eq.s32.totalorder %s26, 0
      %p152 = por %p150, %p151
      %p153 = scmp.ne.s32.totalorder %s141, %s142
      %p154 = scmp.eq.s32.totalorder %s27, 1
      %p155 = por %p153, %p154
      %p157 = scmp.ne.s32.totalorder %s142, %s156
      %p158 = scmp.eq.s32.totalorder %s27, 0
      %p159 = por %p157, %p158
      %s161 = sadd.s32 %s160, 1
      %p164 = scmp.eq.s32.totalorder %s21, 1
      %p165 = scmp.ne.s32.totalorder %s160, %s162
      %p166 = scmp.eq.s32.totalorder %s21, 0
      %p167 = por %p165, %p166
      %p168 = scmp.ne.s32.totalorder %s160, %s162
      %p169 = scmp.eq.s32.totalorder %s26, 1
      %p170 = por %p168, %p169
      %p171 = scmp.ne.s32.totalorder %s162, %s163
      %p172 = scmp.eq.s32.totalorder %s26, 0
      %p173 = por %p171, %p172
      %p174 = scmp.ne.s32.totalorder %s162, %s163
      %p175 = scmp.eq.s32.totalorder %s27, 1
      %p176 = por %p174, %p175
      %p178 = scmp.ne.s32.totalorder %s163, %s177
      %p179 = scmp.eq.s32.totalorder %s27, 0
      %p180 = por %p178, %p179
      %s182 = sadd.s32 %s181, 1
      %p185 = scmp.eq.s32.totalorder %s21, 1
      %p186 = scmp.ne.s32.totalorder %s181, %s183
      %p187 = scmp.eq.s32.totalorder %s21, 0
      %p188 = por %p186, %p187
      %p189 = scmp.ne.s32.totalorder %s181, %s183
      %p190 = scmp.eq.s32.totalorder %s26, 1
      %p191 = por %p189, %p190
      %p192 = scmp.ne.s32.totalorder %s183, %s184
      %p193 = scmp.eq.s32.totalorder %s26, 0
      %p194 = por %p192, %p193
      %p195 = scmp.ne.s32.totalorder %s183, %s184
      %p196 = scmp.eq.s32.totalorder %s27, 1
      %p197 = por %p195, %p196
      %p199 = scmp.ne.s32.totalorder %s184, %s198
      %p200 = scmp.eq.s32.totalorder %s27, 0
      %p201 = por %p199, %p200
      %s203 = sadd.s32 %s202, 1
      %p206 = scmp.eq.s32.totalorder %s21, 1
      %p207 = scmp.ne.s32.totalorder %s202, %s204
      %p208 = scmp.eq.s32.totalorder %s21, 0
      %p209 = por %p207, %p208
      %p210 = scmp.ne.s32.totalorder %s202, %s204
      %p211 = scmp.eq.s32.totalorder %s26, 1
      %p212 = por %p210, %p211
      %p213 = scmp.ne.s32.totalorder %s204, %s205
      %p214 = scmp.eq.s32.totalorder %s26, 0
      %p215 = por %p213, %p214
      %p216 = scmp.ne.s32.totalorder %s204, %s205
      %p217 = scmp.eq.s32.totalorder %s27, 1
      %p218 = por %p216, %p217
      %p220 = scmp.ne.s32.totalorder %s205, %s219
      %p221 = scmp.eq.s32.totalorder %s27, 0
      %p222 = por %p220, %p221
      %s223 = ssub.s32 %s21, %s28
      %p224 = scmp.eq.s32.totalorder %s223, 0
      %s226 = sadd.s32 %s225, 1
      %s227 = scalar_select %p224, %s225, %s226
      %p230 = pneg %p224
      %p231 = scmp.eq.s32.totalorder %s21, 1
      %p232 = por %p230, %p231
      %p233 = scmp.ne.s32.totalorder %s225, %s228
      %p234 = scmp.eq.s32.totalorder %s21, 0
      %p235 = por %p233, %p234
      %p236 = scmp.ne.s32.totalorder %s225, %s228
      %p237 = scmp.eq.s32.totalorder %s26, 1
      %p238 = por %p236, %p237
      %p239 = scmp.ne.s32.totalorder %s228, %s229
      %p240 = scmp.eq.s32.totalorder %s26, 0
      %p241 = por %p239, %p240
      %p242 = scmp.ne.s32.totalorder %s228, %s229
      %p243 = scmp.eq.s32.totalorder %s27, 1
      %p244 = por %p242, %p243
      %p246 = scmp.ne.s32.totalorder %s229, %s245
      %p247 = scmp.eq.s32.totalorder %s27, 0
      %p248 = por %p246, %p247
      %p249 = scmp.le.s32.totalorder 1, %s21
      %p250 = scmp.lt.s32.totalorder %s21, 3
      %p251 = pnand %p249, %p250
      %p252 = pneg %p251
      // Predicated region
      $region9: #{tpu_custom_call.1} parent=5 // pred_check
        _
      $region10: #{tpu_custom_call.1} parent=5 // pred_check_branch
        %254 = sbr.rel (%p251) target = $region12
      $region11: #{tpu_custom_call.1} parent=5 // pred_region
        %s255 = ssub.s32 %s21, 1
        // Predicated region
        $region13: #{tpu_custom_call.1} parent=11 // pred_check
          %p256 = pneg %p68
        $region14: #{tpu_custom_call.1} parent=11 // pred_check_branch
          %258 = sbr.rel (%p256) target = $region16
        $region15: #{tpu_custom_call.1} parent=11 // pred_region
          _
        $region16: #{tpu_custom_call.1} parent=11 // pred_fallthru
          _
        // Predicated region
        $region17: #{tpu_custom_call.1} parent=11 // pred_check
          %p259 = pneg %p89
        $region18: #{tpu_custom_call.1} parent=11 // pred_check_branch
          %261 = sbr.rel (%p259) target = $region20
        $region19: #{tpu_custom_call.1} parent=11 // pred_region
          _
        $region20: #{tpu_custom_call.1} parent=11 // pred_fallthru
          _
        // Predicated region
        $region21: #{tpu_custom_call.1} parent=11 // pred_check
          %p262 = pneg %p110
        $region22: #{tpu_custom_call.1} parent=11 // pred_check_branch
          %264 = sbr.rel (%p262) target = $region24
        $region23: #{tpu_custom_call.1} parent=11 // pred_region
          _
        $region24: #{tpu_custom_call.1} parent=11 // pred_fallthru
          _
        // Predicated region
        $region25: #{tpu_custom_call.1} parent=11 // pred_check
          %p265 = pneg %p131
        $region26: #{tpu_custom_call.1} parent=11 // pred_check_branch
          %267 = sbr.rel (%p265) target = $region28
        $region27: #{tpu_custom_call.1} parent=11 // pred_region
          _
        $region28: #{tpu_custom_call.1} parent=11 // pred_fallthru
          _
        // Predicated region
        $region29: #{tpu_custom_call.1} parent=11 // pred_check
          %p268 = pneg %p152
        $region30: #{tpu_custom_call.1} parent=11 // pred_check_branch
          %270 = sbr.rel (%p268) target = $region32
        $region31: #{tpu_custom_call.1} parent=11 // pred_region
          _
        $region32: #{tpu_custom_call.1} parent=11 // pred_fallthru
          _
        // Predicated region
        $region33: #{tpu_custom_call.1} parent=11 // pred_check
          %p271 = pneg %p173
        $region34: #{tpu_custom_call.1} parent=11 // pred_check_branch
          %273 = sbr.rel (%p271) target = $region36
        $region35: #{tpu_custom_call.1} parent=11 // pred_region
          _
        $region36: #{tpu_custom_call.1} parent=11 // pred_fallthru
          _
        // Predicated region
        $region37: #{tpu_custom_call.1} parent=11 // pred_check
          %p274 = pneg %p194
        $region38: #{tpu_custom_call.1} parent=11 // pred_check_branch
          %276 = sbr.rel (%p274) target = $region40
        $region39: #{tpu_custom_call.1} parent=11 // pred_region
          %s278 = ssub.s32 3136, 3136
          %279 = vsyncadd [#allocation4], %s278
          %s280 = sshll.u32 [#allocation3], 4
          %s281 = int_to_ptr.vmem [resolvable:$true] %s280
          %286 = dma.hbm_to_vmem [thread:$0]  %s7, 3136, %s281, [#allocation4], 64, 64, 4
        $region40: #{tpu_custom_call.1} parent=11 // pred_fallthru
          _
        // Predicated region
        $region41: #{tpu_custom_call.1} parent=11 // pred_check
          %p287 = pneg %p215
        $region42: #{tpu_custom_call.1} parent=11 // pred_check_branch
          %289 = sbr.rel (%p287) target = $region44
        $region43: #{tpu_custom_call.1} parent=11 // pred_region
          _
        $region44: #{tpu_custom_call.1} parent=11 // pred_fallthru
          _
      $region12: #{tpu_custom_call.1} parent=5 // pred_fallthru
        _
      %p290 = scmp.lt.s32.totalorder %s21, 2
      // Predicated region
      $region45: #{tpu_custom_call.1} parent=5 // pred_check
        %p291 = pneg %p290
      $region46: #{tpu_custom_call.1} parent=5 // pred_check_branch
        %293 = sbr.rel (%p291) target = $region48
      $region47: #{tpu_custom_call.1} parent=5 // pred_region
        // Predicated region
        $region49: #{tpu_custom_call.1} parent=47 // pred_check
          %p294 = pneg %p41
        $region50: #{tpu_custom_call.1} parent=47 // pred_check_branch
          %296 = sbr.rel (%p294) target = $region52
        $region51: #{tpu_custom_call.1} parent=47 // pred_region
          %p297 = scmp.lt.s32.totalorder %s21, 1
          %s298 = scalar_select %p297, %s21, 1
          %s299 = smul.addr %s298, 8
          %s300 = smul.addr %s299, 8
          %s301 = scalar_lea.vmem %s0, %s300
        $region52: #{tpu_custom_call.1} parent=47 // pred_fallthru
          _
      $region48: #{tpu_custom_call.1} parent=5 // pred_fallthru
        _
      %p302 = scmp.le.s32.totalorder 1, %s21
      %p303 = scmp.lt.s32.totalorder %s21, 3
      %p304 = pnand %p302, %p303
      %p305 = pneg %p304
      // Predicated region
      $region53: #{tpu_custom_call.1} parent=5 // pred_check
        _
      $region54: #{tpu_custom_call.1} parent=5 // pred_check_branch
        %307 = sbr.rel (%p304) target = $region56
      $region55: #{tpu_custom_call.1} parent=5 // pred_region
        %s308 = ssub.s32 %s21, 1
        // Predicated region
        $region57: #{tpu_custom_call.1} parent=55 // pred_check
          %p309 = pneg %p194
        $region58: #{tpu_custom_call.1} parent=55 // pred_check_branch
          %311 = sbr.rel (%p309) target = $region60
        $region59: #{tpu_custom_call.1} parent=55 // pred_region
          %312 = dma.done [#allocation4], 3136
        $region60: #{tpu_custom_call.1} parent=55 // pred_fallthru
          _
        %p313 = scmp.lt.s32.totalorder %s26, 1
        %s314 = scalar_select %p313, %s26, 1
        %s315 = smul.addr %s314, 8
        %s316 = smul.addr %s315, 8
        %s317 = scalar_lea.vmem %s0, %s316
        %p318 = pneg %p47
        %p319 = pneg %p44
        %p320 = pneg %p68
        %p321 = pneg %p65
        %p322 = pneg %p89
        %p323 = pneg %p86
        %p324 = pneg %p110
        %p325 = pneg %p107
        %p326 = pneg %p131
        %p327 = pneg %p128
        %p328 = pneg %p152
        %p329 = pneg %p149
        %p330 = pneg %p173
        %p331 = pneg %p170
        %p332 = pneg %p194
        %p333 = pneg %p191
        %p334 = pneg %p215
        %p335 = pneg %p212
        %p336 = pneg %p241
        %p337 = pneg %p238
        %s338 = sand.u32 %s228, 1
        %s339 = scalar_lea.sflag [#allocation5], %s338
        %s340 = sand.u32 %s228, 1
        %s341 = smul.addr %s340, 64
        %s342 = scalar_lea.vmem [#allocation6], %s341
        %p343 = scmp.lt.s32.totalorder %s26, 1
        %s344 = scalar_select %p343, %s26, 1
        %s345 = smul.addr %s344, 8
        %s346 = smul.addr %s345, 8
        %s347 = scalar_lea.vmem %s0, %s346
        %v348 = vld [vmem:[%s347] sm:$0xff]
        %v349 = vld [vmem:[%s347 + $0x8] sm:$0xff]
        %v350 = vld [vmem:[%s347 + $0x10] sm:$0xff]
        %v351 = vld [vmem:[%s347 + $0x18] sm:$0xff]
        %v352 = vld [vmem:[%s347 + $0x20] sm:$0xff]
        %v353 = vld [vmem:[%s347 + $0x28] sm:$0xff]
        %v354 = vld [vmem:[%s347 + $0x30] sm:$0xff]
        %v355 = vld [vmem:[%s347 + $0x38] sm:$0xff]
        %v356 = vadd.f32 %v348, %v349
        %357 = vadd.xlane.f32.xlu0 %v356
        %v358 = vpop.xlane.xlu0 %357
        %v359 = vadd.f32 %v350, %v351
        %360 = vadd.xlane.f32.xlu0 %v359
        %v361 = vpop.xlane.xlu0 %360
        %v362 = vadd.f32 %v352, %v353
        %363 = vadd.xlane.f32.xlu0 %v362
        %v364 = vpop.xlane.xlu0 %363
        %v365 = vadd.f32 %v354, %v355
        %366 = vadd.xlane.f32.xlu0 %v365
        %v367 = vpop.xlane.xlu0 %366
        %v368 = vmul.f32 %v358, 0.00390625
        %v369 = vmul.f32 %v361, 0.00390625
        %v370 = vmul.f32 %v364, 0.00390625
        %v371 = vmul.f32 %v367, 0.00390625
        %v372 = vld [vmem:[%s1] sm:$0xff]
        %v373 = vld [vmem:[%s1 + $0x8] sm:$0xff]
        %v374 = vld [vmem:[%s1 + $0x10] sm:$0xff]
        %v375 = vld [vmem:[%s1 + $0x18] sm:$0xff]
        %v376 = vmul.f32 %v368, %v372
        %v377 = vmul.f32 %v369, %v373
        %v378 = vmul.f32 %v370, %v374
        %v379 = vmul.f32 %v371, %v375
        %vm380 = vcmask 15360
        %v381 = vsel %vm380, %v376, 0.0
        %v382 = vsel %vm380, %v377, 0.0
        %v383 = vadd.f32 %v381, %v382
        %v384 = vsel %vm380, %v378, 0.0
        %v385 = vadd.f32 %v383, %v384
        %v386 = vsel %vm380, %v379, 0.0
        %v387 = vadd.f32 %v385, %v386
        %v388 = vrot.slane %v387, 4
        %v389 = vadd.f32 %v387, %v388
        %v390 = vrot.slane %v389, 2
        %v391 = vadd.f32 %v389, %v390
        %v392 = vrot.slane %v391, 1
        %v393 = vadd.f32 %v391, %v392
        %v394 = vld [vmem:[%s2] sm:$0x1]
        %v395 = vadd.f32 %v393, %v394
        %v396 = vmax.f32 %v395, 0.0
        %v397 = vld [vmem:[%s3] sm:$0xff]
        %v398 = vld [vmem:[%s3 + $0x8] sm:$0xff]
        %v399 = vld [vmem:[%s3 + $0x10] sm:$0xff]
        %v400 = vld [vmem:[%s3 + $0x18] sm:$0xff]
        %v401 = vlaneseq
        %v402 = vshrl.u32 %v401, 7
        %v403 = vsub.s32 0, %v402
        %v404 = vrot.slane %v396, %v403
        %v405 = vmul.f32 %v404, %v397
        %v406 = vmul.f32 %v404, %v398
        %v407 = vmul.f32 %v404, %v399
        %v408 = vmul.f32 %v404, %v400
        %v409 = vsel %vm380, %v405, 0.0
        %410 = vadd.xlane.f32.xlu0 %v409
        %v411 = vpop.xlane.xlu0 %410
        %v412 = vsel %vm380, %v406, 0.0
        %413 = vadd.xlane.f32.xlu0 %v412
        %v414 = vpop.xlane.xlu0 %413
        %v415 = vsel %vm380, %v407, 0.0
        %416 = vadd.xlane.f32.xlu0 %v415
        %v417 = vpop.xlane.xlu0 %416
        %v418 = vsel %vm380, %v408, 0.0
        %419 = vadd.xlane.f32.xlu0 %v418
        %v420 = vpop.xlane.xlu0 %419
        %v421 = vld [vmem:[%s4] sm:$0xff]
        %v422 = vld [vmem:[%s4 + $0x8] sm:$0xff]
        %v423 = vld [vmem:[%s4 + $0x10] sm:$0xff]
        %v424 = vld [vmem:[%s4 + $0x18] sm:$0xff]
        %v425 = vadd.f32 %v411, %v421
        %v426 = vadd.f32 %v414, %v422
        %v427 = vadd.f32 %v417, %v423
        %v428 = vadd.f32 %v420, %v424
        %v429 = vxor.u32 %v425, 2147483648
        %v430 = vxor.u32 %v426, 2147483648
        %v431 = vxor.u32 %v427, 2147483648
        %v432 = vxor.u32 %v428, 2147483648
        %v433 = vmul.f32 %v429, 1.442695
        %v434 = vpow.pop %v433
        %v435 = vmul.f32 %v430, 1.442695
        %v436 = vpow.pop %v435
        %v437 = vmul.f32 %v431, 1.442695
        %v438 = vpow.pop %v437
        %v439 = vmul.f32 %v432, 1.442695
        %v440 = vpow.pop %v439
        %v441 = vadd.f32 %v434, 1.0
        %v442 = vadd.f32 %v436, 1.0
        %v443 = vadd.f32 %v438, 1.0
        %v444 = vadd.f32 %v440, 1.0
        %v445 = vrcp.pop %v441
        %v446 = vmul.f32 1.0, %v445
        %v447 = vrcp.pop %v442
        %v448 = vmul.f32 1.0, %v447
        %v449 = vrcp.pop %v443
        %v450 = vmul.f32 1.0, %v449
        %v451 = vrcp.pop %v444
        %v452 = vmul.f32 1.0, %v451
        %454 = vset.pattern.permute.xlu0 0
        %455 = vperm.xlu0 %454, %v446
        %v456 = vpop.permute.xlu0 %455
        %459 = vset.pattern.permute.xlu0 0
        %460 = vperm.xlu0 %459, %v448
        %v461 = vpop.permute.xlu0 %460
        %464 = vset.pattern.permute.xlu0 0
        %465 = vperm.xlu0 %464, %v450
        %v466 = vpop.permute.xlu0 %465
        %469 = vset.pattern.permute.xlu0 0
        %470 = vperm.xlu0 %469, %v452
        %v471 = vpop.permute.xlu0 %470
        %v473 = vmul.f32 %v348, %v456
        %v474 = vmul.f32 %v349, %v456
        %v475 = vmul.f32 %v350, %v461
        %v476 = vmul.f32 %v351, %v461
        %v477 = vmul.f32 %v352, %v466
        %v478 = vmul.f32 %v353, %v466
        %v479 = vmul.f32 %v354, %v471
        %v480 = vmul.f32 %v355, %v471
        %481 = vst [vmem:[%s342] sm:$0xff] %v473
        %482 = vst [vmem:[%s342 + $0x8] sm:$0xff] %v474
        %483 = vst [vmem:[%s342 + $0x10] sm:$0xff] %v475
        %484 = vst [vmem:[%s342 + $0x18] sm:$0xff] %v476
        %485 = vst [vmem:[%s342 + $0x20] sm:$0xff] %v477
        %486 = vst [vmem:[%s342 + $0x28] sm:$0xff] %v478
        %487 = vst [vmem:[%s342 + $0x30] sm:$0xff] %v479
        %488 = vst [vmem:[%s342 + $0x38] sm:$0xff] %v480
        %v489 = vld [vmem:[%s5] sm:$0xff]
        %v490 = vld [vmem:[%s5 + $0x8] sm:$0xff]
        %v491 = vld [vmem:[%s5 + $0x10] sm:$0xff]
        %v492 = vld [vmem:[%s5 + $0x18] sm:$0xff]
        %494 = vset.pattern.permute.xlu0 0
        %495 = vperm.xlu0 %494, %v489
        %v496 = vpop.permute.xlu0 %495
        %499 = vset.pattern.permute.xlu0 0
        %500 = vperm.xlu0 %499, %v490
        %v501 = vpop.permute.xlu0 %500
        %504 = vset.pattern.permute.xlu0 0
        %505 = vperm.xlu0 %504, %v491
        %v506 = vpop.permute.xlu0 %505
        %509 = vset.pattern.permute.xlu0 0
        %510 = vperm.xlu0 %509, %v492
        %v511 = vpop.permute.xlu0 %510
        %v513 = vmul.f32 %v473, %v496
        %v514 = vmul.f32 %v474, %v496
        %v515 = vmul.f32 %v475, %v501
        %v516 = vmul.f32 %v476, %v501
        %v517 = vmul.f32 %v477, %v506
        %v518 = vmul.f32 %v478, %v506
        %v519 = vmul.f32 %v479, %v511
        %v520 = vmul.f32 %v480, %v511
        %v521 = vadd.f32 %v513, %v515
        %v522 = vadd.f32 %v521, %v517
        %v523 = vadd.f32 %v522, %v519
        %v524 = vrot.slane %v523, 4
        %v525 = vadd.f32 %v523, %v524
        %v526 = vrot.slane %v525, 2
        %v527 = vadd.f32 %v525, %v526
        %v528 = vrot.slane %v527, 1
        %v529 = vadd.f32 %v527, %v528
        %v530 = vadd.f32 %v514, %v516
        %v531 = vadd.f32 %v530, %v518
        %v532 = vadd.f32 %v531, %v520
        %v533 = vrot.slane %v532, 4
        %v534 = vadd.f32 %v532, %v533
        %v535 = vrot.slane %v534, 2
        %v536 = vadd.f32 %v534, %v535
        %v537 = vrot.slane %v536, 1
        %v538 = vadd.f32 %v536, %v537
        %539 = vset.pattern.permute.xlu0 1
        %540 = vperm.xlu0 %539, %v489
        %v541 = vpop.permute.xlu0 %540
        %543 = vset.pattern.permute.xlu0 1
        %544 = vperm.xlu0 %543, %v490
        %v545 = vpop.permute.xlu0 %544
        %547 = vset.pattern.permute.xlu0 1
        %548 = vperm.xlu0 %547, %v491
        %v549 = vpop.permute.xlu0 %548
        %551 = vset.pattern.permute.xlu0 1
        %552 = vperm.xlu0 %551, %v492
        %v553 = vpop.permute.xlu0 %552
        %v555 = vmul.f32 %v473, %v541
        %v556 = vmul.f32 %v474, %v541
        %v557 = vmul.f32 %v475, %v545
        %v558 = vmul.f32 %v476, %v545
        %v559 = vmul.f32 %v477, %v549
        %v560 = vmul.f32 %v478, %v549
        %v561 = vmul.f32 %v479, %v553
        %v562 = vmul.f32 %v480, %v553
        %v563 = vadd.f32 %v555, %v557
        %v564 = vadd.f32 %v563, %v559
        %v565 = vadd.f32 %v564, %v561
        %v566 = vrot.slane %v565, 4
        %v567 = vadd.f32 %v565, %v566
        %v568 = vrot.slane %v567, 2
        %v569 = vadd.f32 %v567, %v568
        %v570 = vrot.slane %v569, 1
        %v571 = vadd.f32 %v569, %v570
        %v572 = vadd.f32 %v556, %v558
        %v573 = vadd.f32 %v572, %v560
        %v574 = vadd.f32 %v573, %v562
        %v575 = vrot.slane %v574, 4
        %v576 = vadd.f32 %v574, %v575
        %v577 = vrot.slane %v576, 2
        %v578 = vadd.f32 %v576, %v577
        %v579 = vrot.slane %v578, 1
        %v580 = vadd.f32 %v578, %v579
        %vm581 = vcmask 1040384
        %v582 = vsel %vm581, %v529, %v571
        %v583 = vsel %vm581, %v538, %v580
        %v584 = vld [vmem:[%s6] sm:$0x3]
        %586 = vset.pattern.permute.xlu0 0
        %587 = vperm.xlu0 %586, %v584
        %v588 = vpop.permute.xlu0 %587
        %v590 = vadd.f32 %v582, %v588
        %v591 = vadd.f32 %v583, %v588
        %v592 = vmax.f32 %v590, 0.0
        %v593 = vmax.f32 %v591, 0.0
        %v594 = vld [vmem:[#allocation3] sm:$0xf]
        %595 = vrot.lane.b32.xlu0 %v592, 51
        %v596 = vpop.permute.xlu0 %595
        %597 = vrot.lane.b32.xlu0 %v593, 51
        %v598 = vpop.permute.xlu0 %597
        %v599 = vlaneseq
        %v600 = vand.u32 %v599, 127
        %vm601 = vcmp.lt.s32.totalorder %v600, 51
        %v602 = vsel %vm601, %v596, %v598
        %v603 = vsel %vm601, %v598, %v596
        %v606 = vunpack.c.l.s4 1983009808
        %v607 = vunpack.c.0.s8 %v606
        %v608 = vlaneseq
        %v609 = vshrl.u32 %v608, 7
        %v610 = vsub.s32 %v607, %v609
        %v611 = vrot.slane %v594, %v610
        %v612 = vcombine.high %v611, %v611
        %v615 = vmul.f32 %v603, %v611
        %v616 = vmul.f32 %v602, %v612
        %s617 = scalar_lea.vmem [#allocation3], 4
        %v618 = vld [vmem:[%s617] sm:$0xf]
        %619 = vrot.lane.b32.xlu0 %v592, 50
        %v620 = vpop.permute.xlu0 %619
        %621 = vrot.lane.b32.xlu0 %v593, 50
        %v622 = vpop.permute.xlu0 %621
        %vm623 = vcmp.lt.s32.totalorder %v600, 50
        %v624 = vsel %vm623, %v620, %v622
        %v625 = vsel %vm623, %v622, %v620
        %v628 = vunpack.c.l.s4 1983009808
        %v629 = vunpack.c.0.s8 %v628
        %v630 = vlaneseq
        %v631 = vshrl.u32 %v630, 7
        %v632 = vsub.s32 %v629, %v631
        %v633 = vrot.slane %v618, %v632
        %v634 = vcombine.high %v633, %v633
        %v637 = vmul.f32 %v625, %v633
        %v638 = vmul.f32 %v624, %v634
        %v639 = vadd.f32 %v615, %v637
        %v640 = vadd.f32 %v616, %v638
        %s641 = scalar_lea.vmem [#allocation3], 8
        %v642 = vld [vmem:[%s641] sm:$0xf]
        %643 = vrot.lane.b32.xlu0 %v592, 49
        %v644 = vpop.permute.xlu0 %643
        %645 = vrot.lane.b32.xlu0 %v593, 49
        %v646 = vpop.permute.xlu0 %645
        %vm647 = vcmp.lt.s32.totalorder %v600, 49
        %v648 = vsel %vm647, %v644, %v646
        %v649 = vsel %vm647, %v646, %v644
        %v652 = vunpack.c.l.s4 1983009808
        %v653 = vunpack.c.0.s8 %v652
        %v654 = vlaneseq
        %v655 = vshrl.u32 %v654, 7
        %v656 = vsub.s32 %v653, %v655
        %v657 = vrot.slane %v642, %v656
        %v658 = vcombine.high %v657, %v657
        %v661 = vmul.f32 %v649, %v657
        %v662 = vmul.f32 %v648, %v658
        %v663 = vadd.f32 %v639, %v661
        %v664 = vadd.f32 %v640, %v662
        %s665 = scalar_lea.vmem [#allocation3], 12
        %v666 = vld [vmem:[%s665] sm:$0xf]
        %667 = vrot.lane.b32.xlu0 %v592, 48
        %v668 = vpop.permute.xlu0 %667
        %669 = vrot.lane.b32.xlu0 %v593, 48
        %v670 = vpop.permute.xlu0 %669
        %vm671 = vcmp.lt.s32.totalorder %v600, 48
        %v672 = vsel %vm671, %v668, %v670
        %v673 = vsel %vm671, %v670, %v668
        %v676 = vunpack.c.l.s4 1983009808
        %v677 = vunpack.c.0.s8 %v676
        %v678 = vlaneseq
        %v679 = vshrl.u32 %v678, 7
        %v680 = vsub.s32 %v677, %v679
        %v681 = vrot.slane %v666, %v680
        %v682 = vcombine.high %v681, %v681
        %v685 = vmul.f32 %v673, %v681
        %v686 = vmul.f32 %v672, %v682
        %v687 = vadd.f32 %v663, %v685
        %v688 = vadd.f32 %v664, %v686
        %s689 = scalar_lea.vmem [#allocation3], 16
        %v690 = vld [vmem:[%s689] sm:$0xf]
        %691 = vrot.lane.b32.xlu0 %v592, 47
        %v692 = vpop.permute.xlu0 %691
        %693 = vrot.lane.b32.xlu0 %v593, 47
        %v694 = vpop.permute.xlu0 %693
        %vm695 = vcmp.lt.s32.totalorder %v600, 47
        %v696 = vsel %vm695, %v692, %v694
        %v697 = vsel %vm695, %v694, %v692
        %v700 = vunpack.c.l.s4 1983009808
        %v701 = vunpack.c.0.s8 %v700
        %v702 = vlaneseq
        %v703 = vshrl.u32 %v702, 7
        %v704 = vsub.s32 %v701, %v703
        %v705 = vrot.slane %v690, %v704
        %v706 = vcombine.high %v705, %v705
        %v709 = vmul.f32 %v697, %v705
        %v710 = vmul.f32 %v696, %v706
        %v711 = vadd.f32 %v687, %v709
        %v712 = vadd.f32 %v688, %v710
        %s713 = scalar_lea.vmem [#allocation3], 20
        %v714 = vld [vmem:[%s713] sm:$0xf]
        %715 = vrot.lane.b32.xlu0 %v592, 46
        %v716 = vpop.permute.xlu0 %715
        %717 = vrot.lane.b32.xlu0 %v593, 46
        %v718 = vpop.permute.xlu0 %717
        %vm719 = vcmp.lt.s32.totalorder %v600, 46
        %v720 = vsel %vm719, %v716, %v718
        %v721 = vsel %vm719, %v718, %v716
        %v724 = vunpack.c.l.s4 1983009808
        %v725 = vunpack.c.0.s8 %v724
        %v726 = vlaneseq
        %v727 = vshrl.u32 %v726, 7
        %v728 = vsub.s32 %v725, %v727
        %v729 = vrot.slane %v714, %v728
        %v730 = vcombine.high %v729, %v729
        %v733 = vmul.f32 %v721, %v729
        %v734 = vmul.f32 %v720, %v730
        %v735 = vadd.f32 %v711, %v733
        %v736 = vadd.f32 %v712, %v734
        %s737 = scalar_lea.vmem [#allocation3], 24
        %v738 = vld [vmem:[%s737] sm:$0xf]
        %739 = vrot.lane.b32.xlu0 %v592, 45
        %v740 = vpop.permute.xlu0 %739
        %741 = vrot.lane.b32.xlu0 %v593, 45
        %v742 = vpop.permute.xlu0 %741
        %vm743 = vcmp.lt.s32.totalorder %v600, 45
        %v744 = vsel %vm743, %v740, %v742
        %v745 = vsel %vm743, %v742, %v740
        %v748 = vunpack.c.l.s4 1983009808
        %v749 = vunpack.c.0.s8 %v748
        %v750 = vlaneseq
        %v751 = vshrl.u32 %v750, 7
        %v752 = vsub.s32 %v749, %v751
        %v753 = vrot.slane %v738, %v752
        %v754 = vcombine.high %v753, %v753
        %v757 = vmul.f32 %v745, %v753
        %v758 = vmul.f32 %v744, %v754
        %v759 = vadd.f32 %v735, %v757
        %v760 = vadd.f32 %v736, %v758
        %s761 = scalar_lea.vmem [#allocation3], 28
        %v762 = vld [vmem:[%s761] sm:$0xf]
        %763 = vrot.lane.b32.xlu0 %v592, 35
        %v764 = vpop.permute.xlu0 %763
        %765 = vrot.lane.b32.xlu0 %v593, 35
        %v766 = vpop.permute.xlu0 %765
        %vm767 = vcmp.lt.s32.totalorder %v600, 35
        %v768 = vsel %vm767, %v764, %v766
        %v769 = vsel %vm767, %v766, %v764
        %v772 = vunpack.c.l.s4 1983009808
        %v773 = vunpack.c.0.s8 %v772
        %v774 = vlaneseq
        %v775 = vshrl.u32 %v774, 7
        %v776 = vsub.s32 %v773, %v775
        %v777 = vrot.slane %v762, %v776
        %v778 = vcombine.high %v777, %v777
        %v781 = vmul.f32 %v769, %v777
        %v782 = vmul.f32 %v768, %v778
        %v783 = vadd.f32 %v759, %v781
        %v784 = vadd.f32 %v760, %v782
        %s785 = scalar_lea.vmem [#allocation3], 32
        %v786 = vld [vmem:[%s785] sm:$0xf]
        %787 = vrot.lane.b32.xlu0 %v592, 34
        %v788 = vpop.permute.xlu0 %787
        %789 = vrot.lane.b32.xlu0 %v593, 34
        %v790 = vpop.permute.xlu0 %789
        %vm791 = vcmp.lt.s32.totalorder %v600, 34
        %v792 = vsel %vm791, %v788, %v790
        %v793 = vsel %vm791, %v790, %v788
        %v796 = vunpack.c.l.s4 1983009808
        %v797 = vunpack.c.0.s8 %v796
        %v798 = vlaneseq
        %v799 = vshrl.u32 %v798, 7
        %v800 = vsub.s32 %v797, %v799
        %v801 = vrot.slane %v786, %v800
        %v802 = vcombine.high %v801, %v801
        %v805 = vmul.f32 %v793, %v801
        %v806 = vmul.f32 %v792, %v802
        %v807 = vadd.f32 %v783, %v805
        %v808 = vadd.f32 %v784, %v806
        %s809 = scalar_lea.vmem [#allocation3], 36
        %v810 = vld [vmem:[%s809] sm:$0xf]
        %811 = vrot.lane.b32.xlu0 %v592, 33
        %v812 = vpop.permute.xlu0 %811
        %813 = vrot.lane.b32.xlu0 %v593, 33
        %v814 = vpop.permute.xlu0 %813
        %vm815 = vcmp.lt.s32.totalorder %v600, 33
        %v816 = vsel %vm815, %v812, %v814
        %v817 = vsel %vm815, %v814, %v812
        %v820 = vunpack.c.l.s4 1983009808
        %v821 = vunpack.c.0.s8 %v820
        %v822 = vlaneseq
        %v823 = vshrl.u32 %v822, 7
        %v824 = vsub.s32 %v821, %v823
        %v825 = vrot.slane %v810, %v824
        %v826 = vcombine.high %v825, %v825
        %v829 = vmul.f32 %v817, %v825
        %v830 = vmul.f32 %v816, %v826
        %v831 = vadd.f32 %v807, %v829
        %v832 = vadd.f32 %v808, %v830
        %s833 = scalar_lea.vmem [#allocation3], 40
        %v834 = vld [vmem:[%s833] sm:$0xf]
        %835 = vrot.lane.b32.xlu0 %v592, 32
        %v836 = vpop.permute.xlu0 %835
        %837 = vrot.lane.b32.xlu0 %v593, 32
        %v838 = vpop.permute.xlu0 %837
        %vm839 = vcmp.lt.s32.totalorder %v600, 32
        %v840 = vsel %vm839, %v836, %v838
        %v841 = vsel %vm839, %v838, %v836
        %v844 = vunpack.c.l.s4 1983009808
        %v845 = vunpack.c.0.s8 %v844
        %v846 = vlaneseq
        %v847 = vshrl.u32 %v846, 7
        %v848 = vsub.s32 %v845, %v847
        %v849 = vrot.slane %v834, %v848
        %v850 = vcombine.high %v849, %v849
        %v853 = vmul.f32 %v841, %v849
        %v854 = vmul.f32 %v840, %v850
        %v855 = vadd.f32 %v831, %v853
        %v856 = vadd.f32 %v832, %v854
        %s857 = scalar_lea.vmem [#allocation3], 44
        %v858 = vld [vmem:[%s857] sm:$0xf]
        %859 = vrot.lane.b32.xlu0 %v592, 31
        %v860 = vpop.permute.xlu0 %859
        %861 = vrot.lane.b32.xlu0 %v593, 31
        %v862 = vpop.permute.xlu0 %861
        %vm863 = vcmp.lt.s32.totalorder %v600, 31
        %v864 = vsel %vm863, %v860, %v862
        %v865 = vsel %vm863, %v862, %v860
        %v868 = vunpack.c.l.s4 1983009808
        %v869 = vunpack.c.0.s8 %v868
        %v870 = vlaneseq
        %v871 = vshrl.u32 %v870, 7
        %v872 = vsub.s32 %v869, %v871
        %v873 = vrot.slane %v858, %v872
        %v874 = vcombine.high %v873, %v873
        %v877 = vmul.f32 %v865, %v873
        %v878 = vmul.f32 %v864, %v874
        %v879 = vadd.f32 %v855, %v877
        %v880 = vadd.f32 %v856, %v878
        %s881 = scalar_lea.vmem [#allocation3], 48
        %v882 = vld [vmem:[%s881] sm:$0xf]
        %883 = vrot.lane.b32.xlu0 %v592, 30
        %v884 = vpop.permute.xlu0 %883
        %885 = vrot.lane.b32.xlu0 %v593, 30
        %v886 = vpop.permute.xlu0 %885
        %vm887 = vcmp.lt.s32.totalorder %v600, 30
        %v888 = vsel %vm887, %v884, %v886
        %v889 = vsel %vm887, %v886, %v884
        %v892 = vunpack.c.l.s4 1983009808
        %v893 = vunpack.c.0.s8 %v892
        %v894 = vlaneseq
        %v895 = vshrl.u32 %v894, 7
        %v896 = vsub.s32 %v893, %v895
        %v897 = vrot.slane %v882, %v896
        %v898 = vcombine.high %v897, %v897
        %v901 = vmul.f32 %v889, %v897
        %v902 = vmul.f32 %v888, %v898
        %v903 = vadd.f32 %v879, %v901
        %v904 = vadd.f32 %v880, %v902
        %s905 = scalar_lea.vmem [#allocation3], 52
        %v906 = vld [vmem:[%s905] sm:$0xf]
        %907 = vrot.lane.b32.xlu0 %v592, 29
        %v908 = vpop.permute.xlu0 %907
        %909 = vrot.lane.b32.xlu0 %v593, 29
        %v910 = vpop.permute.xlu0 %909
        %vm911 = vcmp.lt.s32.totalorder %v600, 29
        %v912 = vsel %vm911, %v908, %v910
        %v913 = vsel %vm911, %v910, %v908
        %v916 = vunpack.c.l.s4 1983009808
        %v917 = vunpack.c.0.s8 %v916
        %v918 = vlaneseq
        %v919 = vshrl.u32 %v918, 7
        %v920 = vsub.s32 %v917, %v919
        %v921 = vrot.slane %v906, %v920
        %v922 = vcombine.high %v921, %v921
        %v925 = vmul.f32 %v913, %v921
        %v926 = vmul.f32 %v912, %v922
        %v927 = vadd.f32 %v903, %v925
        %v928 = vadd.f32 %v904, %v926
        %s929 = scalar_lea.vmem [#allocation3], 56
        %v930 = vld [vmem:[%s929] sm:$0xf]
        %931 = vrot.lane.b32.xlu0 %v592, 19
        %v932 = vpop.permute.xlu0 %931
        %933 = vrot.lane.b32.xlu0 %v593, 19
        %v934 = vpop.permute.xlu0 %933
        %vm935 = vcmp.lt.s32.totalorder %v600, 19
        %v936 = vsel %vm935, %v932, %v934
        %v937 = vsel %vm935, %v934, %v932
        %v940 = vunpack.c.l.s4 1983009808
        %v941 = vunpack.c.0.s8 %v940
        %v942 = vlaneseq
        %v943 = vshrl.u32 %v942, 7
        %v944 = vsub.s32 %v941, %v943
        %v945 = vrot.slane %v930, %v944
        %v946 = vcombine.high %v945, %v945
        %v949 = vmul.f32 %v937, %v945
        %v950 = vmul.f32 %v936, %v946
        %v951 = vadd.f32 %v927, %v949
        %v952 = vadd.f32 %v928, %v950
        %s953 = scalar_lea.vmem [#allocation3], 60
        %v954 = vld [vmem:[%s953] sm:$0xf]
        %955 = vrot.lane.b32.xlu0 %v592, 18
        %v956 = vpop.permute.xlu0 %955
        %957 = vrot.lane.b32.xlu0 %v593, 18
        %v958 = vpop.permute.xlu0 %957
        %vm959 = vcmp.lt.s32.totalorder %v600, 18
        %v960 = vsel %vm959, %v956, %v958
        %v961 = vsel %vm959, %v958, %v956
        %v964 = vunpack.c.l.s4 1983009808
        %v965 = vunpack.c.0.s8 %v964
        %v966 = vlaneseq
        %v967 = vshrl.u32 %v966, 7
        %v968 = vsub.s32 %v965, %v967
        %v969 = vrot.slane %v954, %v968
        %v970 = vcombine.high %v969, %v969
        %v973 = vmul.f32 %v961, %v969
        %v974 = vmul.f32 %v960, %v970
        %v975 = vadd.f32 %v951, %v973
        %v976 = vadd.f32 %v952, %v974
        %s977 = scalar_lea.vmem [#allocation3], 64
        %v978 = vld [vmem:[%s977] sm:$0xf]
        %979 = vrot.lane.b32.xlu0 %v592, 17
        %v980 = vpop.permute.xlu0 %979
        %981 = vrot.lane.b32.xlu0 %v593, 17
        %v982 = vpop.permute.xlu0 %981
        %vm983 = vcmp.lt.s32.totalorder %v600, 17
        %v984 = vsel %vm983, %v980, %v982
        %v985 = vsel %vm983, %v982, %v980
        %v988 = vunpack.c.l.s4 1983009808
        %v989 = vunpack.c.0.s8 %v988
        %v990 = vlaneseq
        %v991 = vshrl.u32 %v990, 7
        %v992 = vsub.s32 %v989, %v991
        %v993 = vrot.slane %v978, %v992
        %v994 = vcombine.high %v993, %v993
        %v997 = vmul.f32 %v985, %v993
        %v998 = vmul.f32 %v984, %v994
        %v999 = vadd.f32 %v975, %v997
        %v1000 = vadd.f32 %v976, %v998
        %s1001 = scalar_lea.vmem [#allocation3], 68
        %v1002 = vld [vmem:[%s1001] sm:$0xf]
        %1003 = vrot.lane.b32.xlu0 %v592, 16
        %v1004 = vpop.permute.xlu0 %1003
        %1005 = vrot.lane.b32.xlu0 %v593, 16
        %v1006 = vpop.permute.xlu0 %1005
        %vm1007 = vcmp.lt.s32.totalorder %v600, 16
        %v1008 = vsel %vm1007, %v1004, %v1006
        %v1009 = vsel %vm1007, %v1006, %v1004
        %v1012 = vunpack.c.l.s4 1983009808
        %v1013 = vunpack.c.0.s8 %v1012
        %v1014 = vlaneseq
        %v1015 = vshrl.u32 %v1014, 7
        %v1016 = vsub.s32 %v1013, %v1015
        %v1017 = vrot.slane %v1002, %v1016
        %v1018 = vcombine.high %v1017, %v1017
        %v1021 = vmul.f32 %v1009, %v1017
        %v1022 = vmul.f32 %v1008, %v1018
        %v1023 = vadd.f32 %v999, %v1021
        %v1024 = vadd.f32 %v1000, %v1022
        %s1025 = scalar_lea.vmem [#allocation3], 72
        %v1026 = vld [vmem:[%s1025] sm:$0xf]
        %1027 = vrot.lane.b32.xlu0 %v592, 15
        %v1028 = vpop.permute.xlu0 %1027
        %1029 = vrot.lane.b32.xlu0 %v593, 15
        %v1030 = vpop.permute.xlu0 %1029
        %vm1031 = vcmp.lt.s32.totalorder %v600, 15
        %v1032 = vsel %vm1031, %v1028, %v1030
        %v1033 = vsel %vm1031, %v1030, %v1028
        %v1036 = vunpack.c.l.s4 1983009808
        %v1037 = vunpack.c.0.s8 %v1036
        %v1038 = vlaneseq
        %v1039 = vshrl.u32 %v1038, 7
        %v1040 = vsub.s32 %v1037, %v1039
        %v1041 = vrot.slane %v1026, %v1040
        %v1042 = vcombine.high %v1041, %v1041
        %v1045 = vmul.f32 %v1033, %v1041
        %v1046 = vmul.f32 %v1032, %v1042
        %v1047 = vadd.f32 %v1023, %v1045
        %v1048 = vadd.f32 %v1024, %v1046
        %s1049 = scalar_lea.vmem [#allocation3], 76
        %v1050 = vld [vmem:[%s1049] sm:$0xf]
        %1051 = vrot.lane.b32.xlu0 %v592, 14
        %v1052 = vpop.permute.xlu0 %1051
        %1053 = vrot.lane.b32.xlu0 %v593, 14
        %v1054 = vpop.permute.xlu0 %1053
        %vm1055 = vcmp.lt.s32.totalorder %v600, 14
        %v1056 = vsel %vm1055, %v1052, %v1054
        %v1057 = vsel %vm1055, %v1054, %v1052
        %v1060 = vunpack.c.l.s4 1983009808
        %v1061 = vunpack.c.0.s8 %v1060
        %v1062 = vlaneseq
        %v1063 = vshrl.u32 %v1062, 7
        %v1064 = vsub.s32 %v1061, %v1063
        %v1065 = vrot.slane %v1050, %v1064
        %v1066 = vcombine.high %v1065, %v1065
        %v1069 = vmul.f32 %v1057, %v1065
        %v1070 = vmul.f32 %v1056, %v1066
        %v1071 = vadd.f32 %v1047, %v1069
        %v1072 = vadd.f32 %v1048, %v1070
        %s1073 = scalar_lea.vmem [#allocation3], 80
        %v1074 = vld [vmem:[%s1073] sm:$0xf]
        %1075 = vrot.lane.b32.xlu0 %v592, 13
        %v1076 = vpop.permute.xlu0 %1075
        %1077 = vrot.lane.b32.xlu0 %v593, 13
        %v1078 = vpop.permute.xlu0 %1077
        %vm1079 = vcmp.lt.s32.totalorder %v600, 13
        %v1080 = vsel %vm1079, %v1076, %v1078
        %v1081 = vsel %vm1079, %v1078, %v1076
        %v1084 = vunpack.c.l.s4 1983009808
        %v1085 = vunpack.c.0.s8 %v1084
        %v1086 = vlaneseq
        %v1087 = vshrl.u32 %v1086, 7
        %v1088 = vsub.s32 %v1085, %v1087
        %v1089 = vrot.slane %v1074, %v1088
        %v1090 = vcombine.high %v1089, %v1089
        %v1093 = vmul.f32 %v1081, %v1089
        %v1094 = vmul.f32 %v1080, %v1090
        %v1095 = vadd.f32 %v1071, %v1093
        %v1096 = vadd.f32 %v1072, %v1094
        %s1097 = scalar_lea.vmem [#allocation3], 84
        %v1098 = vld [vmem:[%s1097] sm:$0xf]
        %1099 = vrot.lane.b32.xlu0 %v592, 3
        %v1100 = vpop.permute.xlu0 %1099
        %1101 = vrot.lane.b32.xlu0 %v593, 3
        %v1102 = vpop.permute.xlu0 %1101
        %vm1103 = vcmp.lt.s32.totalorder %v600, 3
        %v1104 = vsel %vm1103, %v1100, %v1102
        %v1105 = vsel %vm1103, %v1102, %v1100
        %v1108 = vunpack.c.l.s4 1983009808
        %v1109 = vunpack.c.0.s8 %v1108
        %v1110 = vlaneseq
        %v1111 = vshrl.u32 %v1110, 7
        %v1112 = vsub.s32 %v1109, %v1111
        %v1113 = vrot.slane %v1098, %v1112
        %v1114 = vcombine.high %v1113, %v1113
        %v1117 = vmul.f32 %v1105, %v1113
        %v1118 = vmul.f32 %v1104, %v1114
        %v1119 = vadd.f32 %v1095, %v1117
        %v1120 = vadd.f32 %v1096, %v1118
        %s1121 = scalar_lea.vmem [#allocation3], 88
        %v1122 = vld [vmem:[%s1121] sm:$0xf]
        %1123 = vrot.lane.b32.xlu0 %v592, 2
        %v1124 = vpop.permute.xlu0 %1123
        %1125 = vrot.lane.b32.xlu0 %v593, 2
        %v1126 = vpop.permute.xlu0 %1125
        %vm1127 = vcmp.lt.s32.totalorder %v600, 2
        %v1128 = vsel %vm1127, %v1124, %v1126
        %v1129 = vsel %vm1127, %v1126, %v1124
        %v1132 = vunpack.c.l.s4 1983009808
        %v1133 = vunpack.c.0.s8 %v1132
        %v1134 = vlaneseq
        %v1135 = vshrl.u32 %v1134, 7
        %v1136 = vsub.s32 %v1133, %v1135
        %v1137 = vrot.slane %v1122, %v1136
        %v1138 = vcombine.high %v1137, %v1137
        %v1141 = vmul.f32 %v1129, %v1137
        %v1142 = vmul.f32 %v1128, %v1138
        %v1143 = vadd.f32 %v1119, %v1141
        %v1144 = vadd.f32 %v1120, %v1142
        %s1145 = scalar_lea.vmem [#allocation3], 92
        %v1146 = vld [vmem:[%s1145] sm:$0xf]
        %1147 = vrot.lane.b32.xlu0 %v592, 1
        %v1148 = vpop.permute.xlu0 %1147
        %1149 = vrot.lane.b32.xlu0 %v593, 1
        %v1150 = vpop.permute.xlu0 %1149
        %vm1151 = vcmp.lt.s32.totalorder %v600, 1
        %v1152 = vsel %vm1151, %v1148, %v1150
        %v1153 = vsel %vm1151, %v1150, %v1148
        %v1156 = vunpack.c.l.s4 1983009808
        %v1157 = vunpack.c.0.s8 %v1156
        %v1158 = vlaneseq
        %v1159 = vshrl.u32 %v1158, 7
        %v1160 = vsub.s32 %v1157, %v1159
        %v1161 = vrot.slane %v1146, %v1160
        %v1162 = vcombine.high %v1161, %v1161
        %v1165 = vmul.f32 %v1153, %v1161
        %v1166 = vmul.f32 %v1152, %v1162
        %v1167 = vadd.f32 %v1143, %v1165
        %v1168 = vadd.f32 %v1144, %v1166
        %s1169 = scalar_lea.vmem [#allocation3], 96
        %v1170 = vld [vmem:[%s1169] sm:$0xf]
        %v1173 = vunpack.c.l.s4 1983009808
        %v1174 = vunpack.c.0.s8 %v1173
        %v1175 = vlaneseq
        %v1176 = vshrl.u32 %v1175, 7
        %v1177 = vsub.s32 %v1174, %v1176
        %v1178 = vrot.slane %v1170, %v1177
        %v1179 = vcombine.high %v1178, %v1178
        %v1182 = vmul.f32 %v592, %v1178
        %v1183 = vmul.f32 %v593, %v1179
        %v1184 = vadd.f32 %v1167, %v1182
        %v1185 = vadd.f32 %v1168, %v1183
        %s1186 = scalar_lea.vmem [#allocation3], 100
        %v1187 = vld [vmem:[%s1186] sm:$0xf]
        %1188 = vrot.lane.b32.xlu0 %v592, 127
        %v1189 = vpop.permute.xlu0 %1188
        %1190 = vrot.lane.b32.xlu0 %v593, 127
        %v1191 = vpop.permute.xlu0 %1190
        %vm1192 = vcmp.lt.s32.totalorder %v600, 127
        %v1193 = vsel %vm1192, %v1189, %v1191
        %v1194 = vsel %vm1192, %v1191, %v1189
        %v1197 = vunpack.c.l.s4 1983009808
        %v1198 = vunpack.c.0.s8 %v1197
        %v1199 = vlaneseq
        %v1200 = vshrl.u32 %v1199, 7
        %v1201 = vsub.s32 %v1198, %v1200
        %v1202 = vrot.slane %v1187, %v1201
        %v1203 = vcombine.high %v1202, %v1202
        %v1206 = vmul.f32 %v1193, %v1202
        %v1207 = vmul.f32 %v1194, %v1203
        %v1208 = vadd.f32 %v1184, %v1206
        %v1209 = vadd.f32 %v1185, %v1207
        %s1210 = scalar_lea.vmem [#allocation3], 104
        %v1211 = vld [vmem:[%s1210] sm:$0xf]
        %1212 = vrot.lane.b32.xlu0 %v592, 126
        %v1213 = vpop.permute.xlu0 %1212
        %1214 = vrot.lane.b32.xlu0 %v593, 126
        %v1215 = vpop.permute.xlu0 %1214
        %vm1216 = vcmp.lt.s32.totalorder %v600, 126
        %v1217 = vsel %vm1216, %v1213, %v1215
        %v1218 = vsel %vm1216, %v1215, %v1213
        %v1221 = vunpack.c.l.s4 1983009808
        %v1222 = vunpack.c.0.s8 %v1221
        %v1223 = vlaneseq
        %v1224 = vshrl.u32 %v1223, 7
        %v1225 = vsub.s32 %v1222, %v1224
        %v1226 = vrot.slane %v1211, %v1225
        %v1227 = vcombine.high %v1226, %v1226
        %v1230 = vmul.f32 %v1217, %v1226
        %v1231 = vmul.f32 %v1218, %v1227
        %v1232 = vadd.f32 %v1208, %v1230
        %v1233 = vadd.f32 %v1209, %v1231
        %s1234 = scalar_lea.vmem [#allocation3], 108
        %v1235 = vld [vmem:[%s1234] sm:$0xf]
        %1236 = vrot.lane.b32.xlu0 %v592, 125
        %v1237 = vpop.permute.xlu0 %1236
        %1238 = vrot.lane.b32.xlu0 %v593, 125
        %v1239 = vpop.permute.xlu0 %1238
        %vm1240 = vcmp.lt.s32.totalorder %v600, 125
        %v1241 = vsel %vm1240, %v1237, %v1239
        %v1242 = vsel %vm1240, %v1239, %v1237
        %v1245 = vunpack.c.l.s4 1983009808
        %v1246 = vunpack.c.0.s8 %v1245
        %v1247 = vlaneseq
        %v1248 = vshrl.u32 %v1247, 7
        %v1249 = vsub.s32 %v1246, %v1248
        %v1250 = vrot.slane %v1235, %v1249
        %v1251 = vcombine.high %v1250, %v1250
        %v1254 = vmul.f32 %v1241, %v1250
        %v1255 = vmul.f32 %v1242, %v1251
        %v1256 = vadd.f32 %v1232, %v1254
        %v1257 = vadd.f32 %v1233, %v1255
        %s1258 = scalar_lea.vmem [#allocation3], 112
        %v1259 = vld [vmem:[%s1258] sm:$0xf]
        %1260 = vrot.lane.b32.xlu0 %v592, 115
        %v1261 = vpop.permute.xlu0 %1260
        %1262 = vrot.lane.b32.xlu0 %v593, 115
        %v1263 = vpop.permute.xlu0 %1262
        %vm1264 = vcmp.lt.s32.totalorder %v600, 115
        %v1265 = vsel %vm1264, %v1261, %v1263
        %v1266 = vsel %vm1264, %v1263, %v1261
        %v1269 = vunpack.c.l.s4 1983009808
        %v1270 = vunpack.c.0.s8 %v1269
        %v1271 = vlaneseq
        %v1272 = vshrl.u32 %v1271, 7
        %v1273 = vsub.s32 %v1270, %v1272
        %v1274 = vrot.slane %v1259, %v1273
        %v1275 = vcombine.high %v1274, %v1274
        %v1278 = vmul.f32 %v1265, %v1274
        %v1279 = vmul.f32 %v1266, %v1275
        %v1280 = vadd.f32 %v1256, %v1278
        %v1281 = vadd.f32 %v1257, %v1279
        %s1282 = scalar_lea.vmem [#allocation3], 116
        %v1283 = vld [vmem:[%s1282] sm:$0xf]
        %1284 = vrot.lane.b32.xlu0 %v592, 114
        %v1285 = vpop.permute.xlu0 %1284
        %1286 = vrot.lane.b32.xlu0 %v593, 114
        %v1287 = vpop.permute.xlu0 %1286
        %vm1288 = vcmp.lt.s32.totalorder %v600, 114
        %v1289 = vsel %vm1288, %v1285, %v1287
        %v1290 = vsel %vm1288, %v1287, %v1285
        %v1293 = vunpack.c.l.s4 1983009808
        %v1294 = vunpack.c.0.s8 %v1293
        %v1295 = vlaneseq
        %v1296 = vshrl.u32 %v1295, 7
        %v1297 = vsub.s32 %v1294, %v1296
        %v1298 = vrot.slane %v1283, %v1297
        %v1299 = vcombine.high %v1298, %v1298
        %v1302 = vmul.f32 %v1289, %v1298
        %v1303 = vmul.f32 %v1290, %v1299
        %v1304 = vadd.f32 %v1280, %v1302
        %v1305 = vadd.f32 %v1281, %v1303
        %s1306 = scalar_lea.vmem [#allocation3], 120
        %v1307 = vld [vmem:[%s1306] sm:$0xf]
        %1308 = vrot.lane.b32.xlu0 %v592, 113
        %v1309 = vpop.permute.xlu0 %1308
        %1310 = vrot.lane.b32.xlu0 %v593, 113
        %v1311 = vpop.permute.xlu0 %1310
        %vm1312 = vcmp.lt.s32.totalorder %v600, 113
        %v1313 = vsel %vm1312, %v1309, %v1311
        %v1314 = vsel %vm1312, %v1311, %v1309
        %v1317 = vunpack.c.l.s4 1983009808
        %v1318 = vunpack.c.0.s8 %v1317
        %v1319 = vlaneseq
        %v1320 = vshrl.u32 %v1319, 7
        %v1321 = vsub.s32 %v1318, %v1320
        %v1322 = vrot.slane %v1307, %v1321
        %v1323 = vcombine.high %v1322, %v1322
        %v1326 = vmul.f32 %v1313, %v1322
        %v1327 = vmul.f32 %v1314, %v1323
        %v1328 = vadd.f32 %v1304, %v1326
        %v1329 = vadd.f32 %v1305, %v1327
        %s1330 = scalar_lea.vmem [#allocation3], 124
        %v1331 = vld [vmem:[%s1330] sm:$0xf]
        %1332 = vrot.lane.b32.xlu0 %v592, 112
        %v1333 = vpop.permute.xlu0 %1332
        %1334 = vrot.lane.b32.xlu0 %v593, 112
        %v1335 = vpop.permute.xlu0 %1334
        %vm1336 = vcmp.lt.s32.totalorder %v600, 112
        %v1337 = vsel %vm1336, %v1333, %v1335
        %v1338 = vsel %vm1336, %v1335, %v1333
        %v1341 = vunpack.c.l.s4 1983009808
        %v1342 = vunpack.c.0.s8 %v1341
        %v1343 = vlaneseq
        %v1344 = vshrl.u32 %v1343, 7
        %v1345 = vsub.s32 %v1342, %v1344
        %v1346 = vrot.slane %v1331, %v1345
        %v1347 = vcombine.high %v1346, %v1346
        %v1350 = vmul.f32 %v1337, %v1346
        %v1351 = vmul.f32 %v1338, %v1347
        %v1352 = vadd.f32 %v1328, %v1350
        %v1353 = vadd.f32 %v1329, %v1351
        %s1354 = scalar_lea.vmem [#allocation3], 128
        %v1355 = vld [vmem:[%s1354] sm:$0xf]
        %1356 = vrot.lane.b32.xlu0 %v592, 111
        %v1357 = vpop.permute.xlu0 %1356
        %1358 = vrot.lane.b32.xlu0 %v593, 111
        %v1359 = vpop.permute.xlu0 %1358
        %vm1360 = vcmp.lt.s32.totalorder %v600, 111
        %v1361 = vsel %vm1360, %v1357, %v1359
        %v1362 = vsel %vm1360, %v1359, %v1357
        %v1365 = vunpack.c.l.s4 1983009808
        %v1366 = vunpack.c.0.s8 %v1365
        %v1367 = vlaneseq
        %v1368 = vshrl.u32 %v1367, 7
        %v1369 = vsub.s32 %v1366, %v1368
        %v1370 = vrot.slane %v1355, %v1369
        %v1371 = vcombine.high %v1370, %v1370
        %v1374 = vmul.f32 %v1361, %v1370
        %v1375 = vmul.f32 %v1362, %v1371
        %v1376 = vadd.f32 %v1352, %v1374
        %v1377 = vadd.f32 %v1353, %v1375
        %s1378 = scalar_lea.vmem [#allocation3], 132
        %v1379 = vld [vmem:[%s1378] sm:$0xf]
        %1380 = vrot.lane.b32.xlu0 %v592, 110
        %v1381 = vpop.permute.xlu0 %1380
        %1382 = vrot.lane.b32.xlu0 %v593, 110
        %v1383 = vpop.permute.xlu0 %1382
        %vm1384 = vcmp.lt.s32.totalorder %v600, 110
        %v1385 = vsel %vm1384, %v1381, %v1383
        %v1386 = vsel %vm1384, %v1383, %v1381
        %v1389 = vunpack.c.l.s4 1983009808
        %v1390 = vunpack.c.0.s8 %v1389
        %v1391 = vlaneseq
        %v1392 = vshrl.u32 %v1391, 7
        %v1393 = vsub.s32 %v1390, %v1392
        %v1394 = vrot.slane %v1379, %v1393
        %v1395 = vcombine.high %v1394, %v1394
        %v1398 = vmul.f32 %v1385, %v1394
        %v1399 = vmul.f32 %v1386, %v1395
        %v1400 = vadd.f32 %v1376, %v1398
        %v1401 = vadd.f32 %v1377, %v1399
        %s1402 = scalar_lea.vmem [#allocation3], 136
        %v1403 = vld [vmem:[%s1402] sm:$0xf]
        %1404 = vrot.lane.b32.xlu0 %v592, 109
        %v1405 = vpop.permute.xlu0 %1404
        %1406 = vrot.lane.b32.xlu0 %v593, 109
        %v1407 = vpop.permute.xlu0 %1406
        %vm1408 = vcmp.lt.s32.totalorder %v600, 109
        %v1409 = vsel %vm1408, %v1405, %v1407
        %v1410 = vsel %vm1408, %v1407, %v1405
        %v1413 = vunpack.c.l.s4 1983009808
        %v1414 = vunpack.c.0.s8 %v1413
        %v1415 = vlaneseq
        %v1416 = vshrl.u32 %v1415, 7
        %v1417 = vsub.s32 %v1414, %v1416
        %v1418 = vrot.slane %v1403, %v1417
        %v1419 = vcombine.high %v1418, %v1418
        %v1422 = vmul.f32 %v1409, %v1418
        %v1423 = vmul.f32 %v1410, %v1419
        %v1424 = vadd.f32 %v1400, %v1422
        %v1425 = vadd.f32 %v1401, %v1423
        %s1426 = scalar_lea.vmem [#allocation3], 140
        %v1427 = vld [vmem:[%s1426] sm:$0xf]
        %1428 = vrot.lane.b32.xlu0 %v592, 99
        %v1429 = vpop.permute.xlu0 %1428
        %1430 = vrot.lane.b32.xlu0 %v593, 99
        %v1431 = vpop.permute.xlu0 %1430
        %vm1432 = vcmp.lt.s32.totalorder %v600, 99
        %v1433 = vsel %vm1432, %v1429, %v1431
        %v1434 = vsel %vm1432, %v1431, %v1429
        %v1437 = vunpack.c.l.s4 1983009808
        %v1438 = vunpack.c.0.s8 %v1437
        %v1439 = vlaneseq
        %v1440 = vshrl.u32 %v1439, 7
        %v1441 = vsub.s32 %v1438, %v1440
        %v1442 = vrot.slane %v1427, %v1441
        %v1443 = vcombine.high %v1442, %v1442
        %v1446 = vmul.f32 %v1433, %v1442
        %v1447 = vmul.f32 %v1434, %v1443
        %v1448 = vadd.f32 %v1424, %v1446
        %v1449 = vadd.f32 %v1425, %v1447
        %s1450 = scalar_lea.vmem [#allocation3], 144
        %v1451 = vld [vmem:[%s1450] sm:$0xf]
        %1452 = vrot.lane.b32.xlu0 %v592, 98
        %v1453 = vpop.permute.xlu0 %1452
        %1454 = vrot.lane.b32.xlu0 %v593, 98
        %v1455 = vpop.permute.xlu0 %1454
        %vm1456 = vcmp.lt.s32.totalorder %v600, 98
        %v1457 = vsel %vm1456, %v1453, %v1455
        %v1458 = vsel %vm1456, %v1455, %v1453
        %v1461 = vunpack.c.l.s4 1983009808
        %v1462 = vunpack.c.0.s8 %v1461
        %v1463 = vlaneseq
        %v1464 = vshrl.u32 %v1463, 7
        %v1465 = vsub.s32 %v1462, %v1464
        %v1466 = vrot.slane %v1451, %v1465
        %v1467 = vcombine.high %v1466, %v1466
        %v1470 = vmul.f32 %v1457, %v1466
        %v1471 = vmul.f32 %v1458, %v1467
        %v1472 = vadd.f32 %v1448, %v1470
        %v1473 = vadd.f32 %v1449, %v1471
        %s1474 = scalar_lea.vmem [#allocation3], 148
        %v1475 = vld [vmem:[%s1474] sm:$0xf]
        %1476 = vrot.lane.b32.xlu0 %v592, 97
        %v1477 = vpop.permute.xlu0 %1476
        %1478 = vrot.lane.b32.xlu0 %v593, 97
        %v1479 = vpop.permute.xlu0 %1478
        %vm1480 = vcmp.lt.s32.totalorder %v600, 97
        %v1481 = vsel %vm1480, %v1477, %v1479
        %v1482 = vsel %vm1480, %v1479, %v1477
        %v1485 = vunpack.c.l.s4 1983009808
        %v1486 = vunpack.c.0.s8 %v1485
        %v1487 = vlaneseq
        %v1488 = vshrl.u32 %v1487, 7
        %v1489 = vsub.s32 %v1486, %v1488
        %v1490 = vrot.slane %v1475, %v1489
        %v1491 = vcombine.high %v1490, %v1490
        %v1494 = vmul.f32 %v1481, %v1490
        %v1495 = vmul.f32 %v1482, %v1491
        %v1496 = vadd.f32 %v1472, %v1494
        %v1497 = vadd.f32 %v1473, %v1495
        %s1498 = scalar_lea.vmem [#allocation3], 152
        %v1499 = vld [vmem:[%s1498] sm:$0xf]
        %1500 = vrot.lane.b32.xlu0 %v592, 96
        %v1501 = vpop.permute.xlu0 %1500
        %1502 = vrot.lane.b32.xlu0 %v593, 96
        %v1503 = vpop.permute.xlu0 %1502
        %vm1504 = vcmp.lt.s32.totalorder %v600, 96
        %v1505 = vsel %vm1504, %v1501, %v1503
        %v1506 = vsel %vm1504, %v1503, %v1501
        %v1509 = vunpack.c.l.s4 1983009808
        %v1510 = vunpack.c.0.s8 %v1509
        %v1511 = vlaneseq
        %v1512 = vshrl.u32 %v1511, 7
        %v1513 = vsub.s32 %v1510, %v1512
        %v1514 = vrot.slane %v1499, %v1513
        %v1515 = vcombine.high %v1514, %v1514
        %v1518 = vmul.f32 %v1505, %v1514
        %v1519 = vmul.f32 %v1506, %v1515
        %v1520 = vadd.f32 %v1496, %v1518
        %v1521 = vadd.f32 %v1497, %v1519
        %s1522 = scalar_lea.vmem [#allocation3], 156
        %v1523 = vld [vmem:[%s1522] sm:$0xf]
        %1524 = vrot.lane.b32.xlu0 %v592, 95
        %v1525 = vpop.permute.xlu0 %1524
        %1526 = vrot.lane.b32.xlu0 %v593, 95
        %v1527 = vpop.permute.xlu0 %1526
        %vm1528 = vcmp.lt.s32.totalorder %v600, 95
        %v1529 = vsel %vm1528, %v1525, %v1527
        %v1530 = vsel %vm1528, %v1527, %v1525
        %v1533 = vunpack.c.l.s4 1983009808
        %v1534 = vunpack.c.0.s8 %v1533
        %v1535 = vlaneseq
        %v1536 = vshrl.u32 %v1535, 7
        %v1537 = vsub.s32 %v1534, %v1536
        %v1538 = vrot.slane %v1523, %v1537
        %v1539 = vcombine.high %v1538, %v1538
        %v1542 = vmul.f32 %v1529, %v1538
        %v1543 = vmul.f32 %v1530, %v1539
        %v1544 = vadd.f32 %v1520, %v1542
        %v1545 = vadd.f32 %v1521, %v1543
        %s1546 = scalar_lea.vmem [#allocation3], 160
        %v1547 = vld [vmem:[%s1546] sm:$0xf]
        %1548 = vrot.lane.b32.xlu0 %v592, 94
        %v1549 = vpop.permute.xlu0 %1548
        %1550 = vrot.lane.b32.xlu0 %v593, 94
        %v1551 = vpop.permute.xlu0 %1550
        %vm1552 = vcmp.lt.s32.totalorder %v600, 94
        %v1553 = vsel %vm1552, %v1549, %v1551
        %v1554 = vsel %vm1552, %v1551, %v1549
        %v1557 = vunpack.c.l.s4 1983009808
        %v1558 = vunpack.c.0.s8 %v1557
        %v1559 = vlaneseq
        %v1560 = vshrl.u32 %v1559, 7
        %v1561 = vsub.s32 %v1558, %v1560
        %v1562 = vrot.slane %v1547, %v1561
        %v1563 = vcombine.high %v1562, %v1562
        %v1566 = vmul.f32 %v1553, %v1562
        %v1567 = vmul.f32 %v1554, %v1563
        %v1568 = vadd.f32 %v1544, %v1566
        %v1569 = vadd.f32 %v1545, %v1567
        %s1570 = scalar_lea.vmem [#allocation3], 164
        %v1571 = vld [vmem:[%s1570] sm:$0xf]
        %1572 = vrot.lane.b32.xlu0 %v592, 93
        %v1573 = vpop.permute.xlu0 %1572
        %1574 = vrot.lane.b32.xlu0 %v593, 93
        %v1575 = vpop.permute.xlu0 %1574
        %vm1576 = vcmp.lt.s32.totalorder %v600, 93
        %v1577 = vsel %vm1576, %v1573, %v1575
        %v1578 = vsel %vm1576, %v1575, %v1573
        %v1581 = vunpack.c.l.s4 1983009808
        %v1582 = vunpack.c.0.s8 %v1581
        %v1583 = vlaneseq
        %v1584 = vshrl.u32 %v1583, 7
        %v1585 = vsub.s32 %v1582, %v1584
        %v1586 = vrot.slane %v1571, %v1585
        %v1587 = vcombine.high %v1586, %v1586
        %v1590 = vmul.f32 %v1577, %v1586
        %v1591 = vmul.f32 %v1578, %v1587
        %v1592 = vadd.f32 %v1568, %v1590
        %v1593 = vadd.f32 %v1569, %v1591
        %s1594 = scalar_lea.vmem [#allocation3], 168
        %v1595 = vld [vmem:[%s1594] sm:$0xf]
        %1596 = vrot.lane.b32.xlu0 %v592, 83
        %v1597 = vpop.permute.xlu0 %1596
        %1598 = vrot.lane.b32.xlu0 %v593, 83
        %v1599 = vpop.permute.xlu0 %1598
        %vm1600 = vcmp.lt.s32.totalorder %v600, 83
        %v1601 = vsel %vm1600, %v1597, %v1599
        %v1602 = vsel %vm1600, %v1599, %v1597
        %v1605 = vunpack.c.l.s4 1983009808
        %v1606 = vunpack.c.0.s8 %v1605
        %v1607 = vlaneseq
        %v1608 = vshrl.u32 %v1607, 7
        %v1609 = vsub.s32 %v1606, %v1608
        %v1610 = vrot.slane %v1595, %v1609
        %v1611 = vcombine.high %v1610, %v1610
        %v1614 = vmul.f32 %v1601, %v1610
        %v1615 = vmul.f32 %v1602, %v1611
        %v1616 = vadd.f32 %v1592, %v1614
        %v1617 = vadd.f32 %v1593, %v1615
        %s1618 = scalar_lea.vmem [#allocation3], 172
        %v1619 = vld [vmem:[%s1618] sm:$0xf]
        %1620 = vrot.lane.b32.xlu0 %v592, 82
        %v1621 = vpop.permute.xlu0 %1620
        %1622 = vrot.lane.b32.xlu0 %v593, 82
        %v1623 = vpop.permute.xlu0 %1622
        %vm1624 = vcmp.lt.s32.totalorder %v600, 82
        %v1625 = vsel %vm1624, %v1621, %v1623
        %v1626 = vsel %vm1624, %v1623, %v1621
        %v1629 = vunpack.c.l.s4 1983009808
        %v1630 = vunpack.c.0.s8 %v1629
        %v1631 = vlaneseq
        %v1632 = vshrl.u32 %v1631, 7
        %v1633 = vsub.s32 %v1630, %v1632
        %v1634 = vrot.slane %v1619, %v1633
        %v1635 = vcombine.high %v1634, %v1634
        %v1638 = vmul.f32 %v1625, %v1634
        %v1639 = vmul.f32 %v1626, %v1635
        %v1640 = vadd.f32 %v1616, %v1638
        %v1641 = vadd.f32 %v1617, %v1639
        %s1642 = scalar_lea.vmem [#allocation3], 176
        %v1643 = vld [vmem:[%s1642] sm:$0xf]
        %1644 = vrot.lane.b32.xlu0 %v592, 81
        %v1645 = vpop.permute.xlu0 %1644
        %1646 = vrot.lane.b32.xlu0 %v593, 81
        %v1647 = vpop.permute.xlu0 %1646
        %vm1648 = vcmp.lt.s32.totalorder %v600, 81
        %v1649 = vsel %vm1648, %v1645, %v1647
        %v1650 = vsel %vm1648, %v1647, %v1645
        %v1653 = vunpack.c.l.s4 1983009808
        %v1654 = vunpack.c.0.s8 %v1653
        %v1655 = vlaneseq
        %v1656 = vshrl.u32 %v1655, 7
        %v1657 = vsub.s32 %v1654, %v1656
        %v1658 = vrot.slane %v1643, %v1657
        %v1659 = vcombine.high %v1658, %v1658
        %v1662 = vmul.f32 %v1649, %v1658
        %v1663 = vmul.f32 %v1650, %v1659
        %v1664 = vadd.f32 %v1640, %v1662
        %v1665 = vadd.f32 %v1641, %v1663
        %s1666 = scalar_lea.vmem [#allocation3], 180
        %v1667 = vld [vmem:[%s1666] sm:$0xf]
        %1668 = vrot.lane.b32.xlu0 %v592, 80
        %v1669 = vpop.permute.xlu0 %1668
        %1670 = vrot.lane.b32.xlu0 %v593, 80
        %v1671 = vpop.permute.xlu0 %1670
        %vm1672 = vcmp.lt.s32.totalorder %v600, 80
        %v1673 = vsel %vm1672, %v1669, %v1671
        %v1674 = vsel %vm1672, %v1671, %v1669
        %v1677 = vunpack.c.l.s4 1983009808
        %v1678 = vunpack.c.0.s8 %v1677
        %v1679 = vlaneseq
        %v1680 = vshrl.u32 %v1679, 7
        %v1681 = vsub.s32 %v1678, %v1680
        %v1682 = vrot.slane %v1667, %v1681
        %v1683 = vcombine.high %v1682, %v1682
        %v1686 = vmul.f32 %v1673, %v1682
        %v1687 = vmul.f32 %v1674, %v1683
        %v1688 = vadd.f32 %v1664, %v1686
        %v1689 = vadd.f32 %v1665, %v1687
        %s1690 = scalar_lea.vmem [#allocation3], 184
        %v1691 = vld [vmem:[%s1690] sm:$0xf]
        %1692 = vrot.lane.b32.xlu0 %v592, 79
        %v1693 = vpop.permute.xlu0 %1692
        %1694 = vrot.lane.b32.xlu0 %v593, 79
        %v1695 = vpop.permute.xlu0 %1694
        %vm1696 = vcmp.lt.s32.totalorder %v600, 79
        %v1697 = vsel %vm1696, %v1693, %v1695
        %v1698 = vsel %vm1696, %v1695, %v1693
        %v1701 = vunpack.c.l.s4 1983009808
        %v1702 = vunpack.c.0.s8 %v1701
        %v1703 = vlaneseq
        %v1704 = vshrl.u32 %v1703, 7
        %v1705 = vsub.s32 %v1702, %v1704
        %v1706 = vrot.slane %v1691, %v1705
        %v1707 = vcombine.high %v1706, %v1706
        %v1710 = vmul.f32 %v1697, %v1706
        %v1711 = vmul.f32 %v1698, %v1707
        %v1712 = vadd.f32 %v1688, %v1710
        %v1713 = vadd.f32 %v1689, %v1711
        %s1714 = scalar_lea.vmem [#allocation3], 188
        %v1715 = vld [vmem:[%s1714] sm:$0xf]
        %1716 = vrot.lane.b32.xlu0 %v592, 78
        %v1717 = vpop.permute.xlu0 %1716
        %1718 = vrot.lane.b32.xlu0 %v593, 78
        %v1719 = vpop.permute.xlu0 %1718
        %vm1720 = vcmp.lt.s32.totalorder %v600, 78
        %v1721 = vsel %vm1720, %v1717, %v1719
        %v1722 = vsel %vm1720, %v1719, %v1717
        %v1725 = vunpack.c.l.s4 1983009808
        %v1726 = vunpack.c.0.s8 %v1725
        %v1727 = vlaneseq
        %v1728 = vshrl.u32 %v1727, 7
        %v1729 = vsub.s32 %v1726, %v1728
        %v1730 = vrot.slane %v1715, %v1729
        %v1731 = vcombine.high %v1730, %v1730
        %v1734 = vmul.f32 %v1721, %v1730
        %v1735 = vmul.f32 %v1722, %v1731
        %v1736 = vadd.f32 %v1712, %v1734
        %v1737 = vadd.f32 %v1713, %v1735
        %s1738 = scalar_lea.vmem [#allocation3], 192
        %v1739 = vld [vmem:[%s1738] sm:$0xf]
        %1740 = vrot.lane.b32.xlu0 %v592, 77
        %v1741 = vpop.permute.xlu0 %1740
        %1742 = vrot.lane.b32.xlu0 %v593, 77
        %v1743 = vpop.permute.xlu0 %1742
        %vm1744 = vcmp.lt.s32.totalorder %v600, 77
        %v1745 = vsel %vm1744, %v1741, %v1743
        %v1746 = vsel %vm1744, %v1743, %v1741
        %v1749 = vunpack.c.l.s4 1983009808
        %v1750 = vunpack.c.0.s8 %v1749
        %v1751 = vlaneseq
        %v1752 = vshrl.u32 %v1751, 7
        %v1753 = vsub.s32 %v1750, %v1752
        %v1754 = vrot.slane %v1739, %v1753
        %v1755 = vcombine.high %v1754, %v1754
        %v1758 = vmul.f32 %v1745, %v1754
        %v1759 = vmul.f32 %v1746, %v1755
        %v1760 = vadd.f32 %v1736, %v1758
        %v1761 = vadd.f32 %v1737, %v1759
        %v1762 = vld [vmem:[#allocation2] sm:$0x1]
        %vm1763 = vcmask 1041408
        %v1764 = vsel %vm1763, %v1760, 0.0
        %v1765 = vrot.slane %v1764, 4
        %v1766 = vadd.f32 %v1764, %v1765
        %v1767 = vrot.slane %v1766, 2
        %v1768 = vadd.f32 %v1766, %v1767
        %v1769 = vrot.slane %v1768, 1
        %v1770 = vadd.f32 %v1768, %v1769
        %v1771 = vsel %vm1763, %v1761, 0.0
        %v1772 = vrot.slane %v1771, 4
        %v1773 = vadd.f32 %v1771, %v1772
        %v1774 = vrot.slane %v1773, 2
        %v1775 = vadd.f32 %v1773, %v1774
        %v1776 = vrot.slane %v1775, 1
        %v1777 = vadd.f32 %v1775, %v1776
        %1779 = vset.pattern.permute.xlu0 0
        %1780 = vperm.xlu0 %1779, %v1762
        %v1781 = vpop.permute.xlu0 %1780
        %v1783 = vlaneseq
        %v1784 = vshrl.u32 %v1783, 7
        %v1785 = vsub.s32 0, %v1784
        %v1786 = vrot.slane %v1781, %v1785
        %v1787 = vadd.f32 %v1770, %v1786
        %v1788 = vadd.f32 %v1777, %v1786
        %v1789 = vxor.u32 %v1787, 2147483648
        %v1790 = vxor.u32 %v1788, 2147483648
        %v1791 = vmul.f32 %v1789, 1.442695
        %v1792 = vpow.pop %v1791
        %v1793 = vmul.f32 %v1790, 1.442695
        %v1794 = vpow.pop %v1793
        %v1795 = vadd.f32 %v1792, 1.0
        %v1796 = vadd.f32 %v1794, 1.0
        %v1797 = vrcp.pop %v1795
        %v1798 = vmul.f32 1.0, %v1797
        %v1799 = vrcp.pop %v1796
        %v1800 = vmul.f32 1.0, %v1799
        %v1801 = vld [vmem:[%s342] sm:$0xff]
        %v1802 = vld [vmem:[%s342 + $0x8] sm:$0xff]
        %v1803 = vld [vmem:[%s342 + $0x10] sm:$0xff]
        %v1804 = vld [vmem:[%s342 + $0x18] sm:$0xff]
        %v1805 = vld [vmem:[%s342 + $0x20] sm:$0xff]
        %v1806 = vld [vmem:[%s342 + $0x28] sm:$0xff]
        %v1807 = vld [vmem:[%s342 + $0x30] sm:$0xff]
        %v1808 = vld [vmem:[%s342 + $0x38] sm:$0xff]
        %v1809 = vmul.f32 %v1801, %v1798
        %v1810 = vmul.f32 %v1802, %v1800
        %v1811 = vmul.f32 %v1803, %v1798
        %v1812 = vmul.f32 %v1804, %v1800
        %v1813 = vmul.f32 %v1805, %v1798
        %v1814 = vmul.f32 %v1806, %v1800
        %v1815 = vmul.f32 %v1807, %v1798
        %v1816 = vmul.f32 %v1808, %v1800
        %1817 = vst [vmem:[%s342] sm:$0xff] %v1809
        %1818 = vst [vmem:[%s342 + $0x8] sm:$0xff] %v1810
        %1819 = vst [vmem:[%s342 + $0x10] sm:$0xff] %v1811
        %1820 = vst [vmem:[%s342 + $0x18] sm:$0xff] %v1812
        %1821 = vst [vmem:[%s342 + $0x20] sm:$0xff] %v1813
        %1822 = vst [vmem:[%s342 + $0x28] sm:$0xff] %v1814
        %1823 = vst [vmem:[%s342 + $0x30] sm:$0xff] %v1815
        %1824 = vst [vmem:[%s342 + $0x38] sm:$0xff] %v1816
        %s1825 = sand.u32 %s228, 1
        %s1826 = scalar_lea.sflag [#allocation5], %s1825
        %s1827 = sand.u32 %s228, 1
        %s1828 = smul.addr %s1827, 64
        %s1829 = scalar_lea.vmem [#allocation6], %s1828
        // Predicated region
        $region61: #{tpu_custom_call.1} parent=55 // pred_check
          %p1830 = pneg %p238
        $region62: #{tpu_custom_call.1} parent=55 // pred_check_branch
          %1832 = sbr.rel (%p1830) target = $region64
        $region63: #{tpu_custom_call.1} parent=55 // pred_region
          %s1834 = ssub.s32 1024, 1024
          %1835 = vsyncadd %s1826, %s1834
          %s1836 = smul.addr %s26, 8
          %s1837 = smul.addr %s1836, 128
          %s1838 = scalar_lea.hbm %s9, %s1837
          %s1839 = sshll.u32 %s1829, 4
          %s1840 = int_to_ptr.vmem [resolvable:$true] %s1839
          %1845 = dma.vmem_to_hbm [thread:$0]  %s1840, 1024, %s1838, %s1826, 256, 256, 16
        $region64: #{tpu_custom_call.1} parent=55 // pred_fallthru
          _
      $region56: #{tpu_custom_call.1} parent=5 // pred_fallthru
        _
      %p1846 = scmp.le.s32.totalorder 2, %s21
      // Predicated region
      $region65: #{tpu_custom_call.1} parent=5 // pred_check
        %p1847 = pneg %p1846
      $region66: #{tpu_custom_call.1} parent=5 // pred_check_branch
        %1849 = sbr.rel (%p1847) target = $region68
      $region67: #{tpu_custom_call.1} parent=5 // pred_region
        %s1850 = ssub.s32 %s21, 2
        // Predicated region
        $region69: #{tpu_custom_call.1} parent=67 // pred_check
          %p1851 = pneg %p244
        $region70: #{tpu_custom_call.1} parent=67 // pred_check_branch
          %1853 = sbr.rel (%p1851) target = $region72
        $region71: #{tpu_custom_call.1} parent=67 // pred_region
          %s1854 = sand.u32 %s229, 1
          %s1855 = scalar_lea.sflag [#allocation5], %s1854
          %s1856 = sand.u32 %s229, 1
          %s1857 = smul.addr %s1856, 64
          %s1858 = scalar_lea.vmem [#allocation6], %s1857
          %1859 = dma.done %s1855, 1024
        $region72: #{tpu_custom_call.1} parent=67 // pred_fallthru
          _
      $region68: #{tpu_custom_call.1} parent=5 // pred_fallthru
        _
    $region6: #{tpu_custom_call.1} parent=1 // loop_footer
      %s25 = sadd.s32 1, %s21
    $region7: #{tpu_custom_call.1} parent=1 // loop_footer_branch
      %20 = sbr.rel target = $region3
    $region8: #{tpu_custom_call.1} parent=1 // loop_exit
      _
    %1860 = vsyncpa [#allocation4], 1
    %s1861 = scalar_lea.sflag [#allocation4], 1
    %1862 = vsyncpa %s1861, 1
    %1863 = vsyncpa [#allocation5], 1
    %s1864 = scalar_lea.sflag [#allocation5], 1
    %1865 = vsyncpa %s1864, 1

</llo_original>
